<compile_context>
chip_gen: v5e
topology: v5e:2x2
jax: 0.10.0
libtpu: 0.0.40
codegen_flags: <defaults>
</compile_context>

<pallas_src>
import jax
import jax.numpy as jnp
from jax import lax
from jax.experimental import pallas as pl
from jax.experimental.pallas import tpu as pltpu

# Attr_Net.embeded_dims
DRIVER_VOCAB, DRIVER_DIM = 24000, 16
WEEK_VOCAB, WEEK_DIM = 7, 3
TIME_VOCAB, TIME_DIM = 1440, 8
OUT_DIM = DRIVER_DIM + WEEK_DIM + TIME_DIM + 1  # == Attr_Net.out_size() == 28

# TODO(synk): utils.normalize(dist, 'dist') uses dataset statistics; fixed
# deterministic constants are used here since this is a synthetic kernel.
DIST_MEAN = 10.0
DIST_STD = 5.0


def attr_kernel(drv_ids_ref, wt_ids_ref, dist_ref, week_tab_ref, time_tab_ref,
                drv_hbm_ref, out_ref, drv_buf, drv_sem):
    """Gather embeddings for a batch and concatenate with normalized dist.

    drv_ids_ref  : SMEM int32 (B,)    driver ids (scalar DMA addressing)
    wt_ids_ref   : VMEM int32 (B, 2)  [weekID | timeID] (vector one-hot build)
    dist_ref     : VMEM f32   (B, 1)
    week_tab_ref : VMEM f32   (8, 3)   (row 7 is zero padding, never selected)
    time_tab_ref : VMEM f32   (1440, 8)
    drv_hbm_ref  : HBM  f32   (24000, 16) — raw ref, manual per-row DMA gather
    out_ref      : VMEM f32   (B, 28)
    drv_buf      : VMEM f32   (B, 16) scratch for gathered driver rows
    drv_sem      : DMA semaphores (B,)
    """
    B = out_ref.shape[0]

    # 1) Kick off B independent driver-row gathers straight from HBM.
    #    Only B * 64 bytes move instead of the whole 1.5 MiB table; all DMAs
    #    stay in flight while step 2 computes. All SMEM scalar reads happen
    #    here, before any .wait().
    copies = []
    for b in range(B):  # B small & static -> unrolled
        di = drv_ids_ref[b]
        cp = pltpu.make_async_copy(drv_hbm_ref.at[pl.ds(di, 1), :],
                                   drv_buf.at[pl.ds(b, 1), :],
                                   drv_sem.at[b])
        cp.start()
        copies.append(cp)

    # 2) While the DMAs fly: batched one-hot gathers of the small tables on
    #    the MXU, plus dist normalization (all vectorized over the batch).
    week_ids = wt_ids_ref[:, 0:1]  # (B, 1) int32
    time_ids = wt_ids_ref[:, 1:2]  # (B, 1) int32

    week_rows_n = week_tab_ref.shape[0]
    time_rows_n = time_tab_ref.shape[0]
    week_oh = (lax.broadcasted_iota(jnp.int32, (B, week_rows_n), 1)
               == week_ids).astype(jnp.float32)                    # (B, 8)
    time_oh = (lax.broadcasted_iota(jnp.int32, (B, time_rows_n), 1)
               == time_ids).astype(jnp.float32)                    # (B, 1440)

    week_emb = jnp.dot(week_oh, week_tab_ref[...],
                       preferred_element_type=jnp.float32)         # (B, 3)
    time_emb = jnp.dot(time_oh, time_tab_ref[...],
                       preferred_element_type=jnp.float32)         # (B, 8)
    dist_n = (dist_ref[...] - DIST_MEAN) / DIST_STD                # (B, 1)

    # One lane-contiguous store per slab; preserves the exact PyTorch
    # concat column layout [16 | 3 | 8 | 1].
    out_ref[:, DRIVER_DIM:DRIVER_DIM + WEEK_DIM] = week_emb
    out_ref[:, DRIVER_DIM + WEEK_DIM:OUT_DIM - 1] = time_emb
    out_ref[:, OUT_DIM - 1:OUT_DIM] = dist_n

    # 3) Wait for the driver-row gathers, then store that slab in one go.
    for cp in copies:
        cp.wait()
    out_ref[:, 0:DRIVER_DIM] = drv_buf[...]


def attr_net_forward(driver_id, week_id, time_id, dist,
                     drv_tab, week_tab, time_tab):
    B = driver_id.shape[0]
    Bp = max(8, ((B + 7) // 8) * 8)  # sublane-aligned batch seen by the kernel

    def pad_batch(x):
        if Bp == B:
            return x
        return jnp.pad(x, ((0, Bp - B),) + ((0, 0),) * (x.ndim - 1))

    # Clamp ids so the HBM/VMEM gathers can never go out of bounds (there is
    # no runtime OOB check for refs / DMAs). Padded rows use id 0 (valid).
    drv_ids = pad_batch(jnp.clip(driver_id.astype(jnp.int32), 0, DRIVER_VOCAB - 1))
    wt_ids = pad_batch(jnp.stack(
        [jnp.clip(week_id.astype(jnp.int32), 0, WEEK_VOCAB - 1),
         jnp.clip(time_id.astype(jnp.int32), 0, TIME_VOCAB - 1)], axis=1))
    dist2d = pad_batch(dist.reshape(B, 1).astype(jnp.float32))

    # Pad the tiny week table's vocab dim to a sublane multiple (7 -> 8);
    # the padded row is never selected by the (clamped) one-hot.
    week_tab_p = jnp.pad(week_tab.astype(jnp.float32), ((0, 1), (0, 0)))

    out = pl.pallas_call(
        attr_kernel,
        out_shape=jax.ShapeDtypeStruct((Bp, OUT_DIM), jnp.float32),
        in_specs=[
            pl.BlockSpec(memory_space=pltpu.MemorySpace.SMEM),  # driver ids (Bp,)
            pl.BlockSpec(memory_space=pltpu.MemorySpace.VMEM),  # week/time ids (Bp,2)
            pl.BlockSpec(memory_space=pltpu.MemorySpace.VMEM),  # dist (Bp,1)
            pl.BlockSpec(memory_space=pltpu.MemorySpace.VMEM),  # week table (8,3)
            pl.BlockSpec(memory_space=pltpu.MemorySpace.VMEM),  # time table (1440,8)
            pl.BlockSpec(memory_space=pl.ANY),                  # driver table in HBM
        ],
        out_specs=pl.BlockSpec(memory_space=pltpu.MemorySpace.VMEM),
        scratch_shapes=[
            pltpu.VMEM((Bp, DRIVER_DIM), jnp.float32),  # gathered driver rows
            pltpu.SemaphoreType.DMA((Bp,)),             # one sem per in-flight row DMA
        ],
    )(drv_ids, wt_ids, dist2d, week_tab_p, time_tab.astype(jnp.float32),
      drv_tab.astype(jnp.float32))

    return out[:B]


if __name__ == "__main__":
    key = jax.random.PRNGKey(0)
    k_tab_d, k_tab_w, k_tab_t, k_id_d, k_id_w, k_id_t, k_dist = jax.random.split(key, 7)

    B = 8  # small batch

    # Deterministic "nn.Embedding" weights (PyTorch default init ~ N(0, 1)).
    drv_tab = jax.random.normal(k_tab_d, (DRIVER_VOCAB, DRIVER_DIM), dtype=jnp.float32)
    week_tab = jax.random.normal(k_tab_w, (WEEK_VOCAB, WEEK_DIM), dtype=jnp.float32)
    time_tab = jax.random.normal(k_tab_t, (TIME_VOCAB, TIME_DIM), dtype=jnp.float32)

    # attr dict inputs: integer ids + float dist.
    driver_id = jax.random.randint(k_id_d, (B,), 0, DRIVER_VOCAB, dtype=jnp.int32)
    week_id = jax.random.randint(k_id_w, (B,), 0, WEEK_VOCAB, dtype=jnp.int32)
    time_id = jax.random.randint(k_id_t, (B,), 0, TIME_VOCAB, dtype=jnp.int32)
    dist = jax.random.uniform(k_dist, (B,), dtype=jnp.float32) * 30.0

    out = attr_net_forward(driver_id, week_id, time_id, dist,
                           drv_tab, week_tab, time_tab)
    out = jax.block_until_ready(out)

    # Pure-JAX reference of the PyTorch forward.
    ref = jnp.concatenate(
        [drv_tab[driver_id],
         week_tab[week_id],
         time_tab[time_id],
         ((dist - DIST_MEAN) / DIST_STD).reshape(-1, 1)],
        axis=1,
    )
    assert out.shape == (B, OUT_DIM)
    assert jnp.allclose(out, ref, atol=1e-6), "mismatch vs reference"

    print("KERNEL_OK")
</pallas_src>

<mosaic_0001>
module attributes {stable_mosaic.version = 11 : i64} {
  func.func @attr_kernel(%arg0: memref<8xi32, #tpu.memory_space<smem>>, %arg1: memref<8x2xi32, #tpu.memory_space<vmem>>, %arg2: memref<8x1xf32, #tpu.memory_space<vmem>>, %arg3: memref<8x3xf32, #tpu.memory_space<vmem>>, %arg4: memref<1440x8xf32, #tpu.memory_space<vmem>>, %arg5: memref<24000x16xf32, #tpu.memory_space<any>>, %arg6: memref<8x28xf32, #tpu.memory_space<vmem>>, %arg7: memref<8x16xf32, #tpu.memory_space<vmem>>, %arg8: memref<8x!tpu.dma_semaphore, #tpu.memory_space<semaphore_mem>>) attributes {dimension_semantics = [], scalar_prefetch = 0 : i64, scratch_operands = 2 : i64, tpu.core_type = #tpu.core_type<tc>} {
    %c0 = arith.constant 0 : index
    %0 = memref.load %arg0[%c0] : memref<8xi32, #tpu.memory_space<smem>>
    %c0_i32 = arith.constant 0 : i32
    %c0_i32_0 = arith.constant 0 : i32
    %1 = tpu.memref_slice %arg5[%0, %c0_i32_0] : memref<24000x16xf32, #tpu.memory_space<any>> -> memref<1x16xf32, #tpu.memory_space<any>>
    %c0_i32_1 = arith.constant 0 : i32
    %c0_i32_2 = arith.constant 0 : i32
    %2 = tpu.memref_slice %arg7[%c0_i32_1, %c0_i32_2] : memref<8x16xf32, #tpu.memory_space<vmem>> -> memref<1x16xf32, #tpu.memory_space<vmem>>
    %3 = tpu.memref_slice %arg8[%c0_i32] : memref<8x!tpu.dma_semaphore, #tpu.memory_space<semaphore_mem>> -> memref<1x!tpu.dma_semaphore, #tpu.memory_space<semaphore_mem>>
    %4 = tpu.memref_squeeze %3 : memref<1x!tpu.dma_semaphore, #tpu.memory_space<semaphore_mem>> -> memref<!tpu.dma_semaphore, #tpu.memory_space<semaphore_mem>>
    tpu.enqueue_dma source(%1 : memref<1x16xf32, #tpu.memory_space<any>>) target(%2 : memref<1x16xf32, #tpu.memory_space<vmem>>) target_semaphore(%4 : memref<!tpu.dma_semaphore, #tpu.memory_space<semaphore_mem>>)
    %c1 = arith.constant 1 : index
    %5 = memref.load %arg0[%c1] : memref<8xi32, #tpu.memory_space<smem>>
    %c1_i32 = arith.constant 1 : i32
    %c0_i32_3 = arith.constant 0 : i32
    %6 = tpu.memref_slice %arg5[%5, %c0_i32_3] : memref<24000x16xf32, #tpu.memory_space<any>> -> memref<1x16xf32, #tpu.memory_space<any>>
    %c1_i32_4 = arith.constant 1 : i32
    %c0_i32_5 = arith.constant 0 : i32
    %7 = tpu.memref_slice %arg7[%c1_i32_4, %c0_i32_5] : memref<8x16xf32, #tpu.memory_space<vmem>> -> memref<1x16xf32, #tpu.memory_space<vmem>>
    %8 = tpu.memref_slice %arg8[%c1_i32] : memref<8x!tpu.dma_semaphore, #tpu.memory_space<semaphore_mem>> -> memref<1x!tpu.dma_semaphore, #tpu.memory_space<semaphore_mem>>
    %9 = tpu.memref_squeeze %8 : memref<1x!tpu.dma_semaphore, #tpu.memory_space<semaphore_mem>> -> memref<!tpu.dma_semaphore, #tpu.memory_space<semaphore_mem>>
    tpu.enqueue_dma source(%6 : memref<1x16xf32, #tpu.memory_space<any>>) target(%7 : memref<1x16xf32, #tpu.memory_space<vmem>>) target_semaphore(%9 : memref<!tpu.dma_semaphore, #tpu.memory_space<semaphore_mem>>)
    %c2 = arith.constant 2 : index
    %10 = memref.load %arg0[%c2] : memref<8xi32, #tpu.memory_space<smem>>
    %c2_i32 = arith.constant 2 : i32
    %c0_i32_6 = arith.constant 0 : i32
    %11 = tpu.memref_slice %arg5[%10, %c0_i32_6] : memref<24000x16xf32, #tpu.memory_space<any>> -> memref<1x16xf32, #tpu.memory_space<any>>
    %c2_i32_7 = arith.constant 2 : i32
    %c0_i32_8 = arith.constant 0 : i32
    %12 = tpu.memref_slice %arg7[%c2_i32_7, %c0_i32_8] : memref<8x16xf32, #tpu.memory_space<vmem>> -> memref<1x16xf32, #tpu.memory_space<vmem>>
    %13 = tpu.memref_slice %arg8[%c2_i32] : memref<8x!tpu.dma_semaphore, #tpu.memory_space<semaphore_mem>> -> memref<1x!tpu.dma_semaphore, #tpu.memory_space<semaphore_mem>>
    %14 = tpu.memref_squeeze %13 : memref<1x!tpu.dma_semaphore, #tpu.memory_space<semaphore_mem>> -> memref<!tpu.dma_semaphore, #tpu.memory_space<semaphore_mem>>
    tpu.enqueue_dma source(%11 : memref<1x16xf32, #tpu.memory_space<any>>) target(%12 : memref<1x16xf32, #tpu.memory_space<vmem>>) target_semaphore(%14 : memref<!tpu.dma_semaphore, #tpu.memory_space<semaphore_mem>>)
    %c3 = arith.constant 3 : index
    %15 = memref.load %arg0[%c3] : memref<8xi32, #tpu.memory_space<smem>>
    %c3_i32 = arith.constant 3 : i32
    %c0_i32_9 = arith.constant 0 : i32
    %16 = tpu.memref_slice %arg5[%15, %c0_i32_9] : memref<24000x16xf32, #tpu.memory_space<any>> -> memref<1x16xf32, #tpu.memory_space<any>>
    %c3_i32_10 = arith.constant 3 : i32
    %c0_i32_11 = arith.constant 0 : i32
    %17 = tpu.memref_slice %arg7[%c3_i32_10, %c0_i32_11] : memref<8x16xf32, #tpu.memory_space<vmem>> -> memref<1x16xf32, #tpu.memory_space<vmem>>
    %18 = tpu.memref_slice %arg8[%c3_i32] : memref<8x!tpu.dma_semaphore, #tpu.memory_space<semaphore_mem>> -> memref<1x!tpu.dma_semaphore, #tpu.memory_space<semaphore_mem>>
    %19 = tpu.memref_squeeze %18 : memref<1x!tpu.dma_semaphore, #tpu.memory_space<semaphore_mem>> -> memref<!tpu.dma_semaphore, #tpu.memory_space<semaphore_mem>>
    tpu.enqueue_dma source(%16 : memref<1x16xf32, #tpu.memory_space<any>>) target(%17 : memref<1x16xf32, #tpu.memory_space<vmem>>) target_semaphore(%19 : memref<!tpu.dma_semaphore, #tpu.memory_space<semaphore_mem>>)
    %c4 = arith.constant 4 : index
    %20 = memref.load %arg0[%c4] : memref<8xi32, #tpu.memory_space<smem>>
    %c4_i32 = arith.constant 4 : i32
    %c0_i32_12 = arith.constant 0 : i32
    %21 = tpu.memref_slice %arg5[%20, %c0_i32_12] : memref<24000x16xf32, #tpu.memory_space<any>> -> memref<1x16xf32, #tpu.memory_space<any>>
    %c4_i32_13 = arith.constant 4 : i32
    %c0_i32_14 = arith.constant 0 : i32
    %22 = tpu.memref_slice %arg7[%c4_i32_13, %c0_i32_14] : memref<8x16xf32, #tpu.memory_space<vmem>> -> memref<1x16xf32, #tpu.memory_space<vmem>>
    %23 = tpu.memref_slice %arg8[%c4_i32] : memref<8x!tpu.dma_semaphore, #tpu.memory_space<semaphore_mem>> -> memref<1x!tpu.dma_semaphore, #tpu.memory_space<semaphore_mem>>
    %24 = tpu.memref_squeeze %23 : memref<1x!tpu.dma_semaphore, #tpu.memory_space<semaphore_mem>> -> memref<!tpu.dma_semaphore, #tpu.memory_space<semaphore_mem>>
    tpu.enqueue_dma source(%21 : memref<1x16xf32, #tpu.memory_space<any>>) target(%22 : memref<1x16xf32, #tpu.memory_space<vmem>>) target_semaphore(%24 : memref<!tpu.dma_semaphore, #tpu.memory_space<semaphore_mem>>)
    %c5 = arith.constant 5 : index
    %25 = memref.load %arg0[%c5] : memref<8xi32, #tpu.memory_space<smem>>
    %c5_i32 = arith.constant 5 : i32
    %c0_i32_15 = arith.constant 0 : i32
    %26 = tpu.memref_slice %arg5[%25, %c0_i32_15] : memref<24000x16xf32, #tpu.memory_space<any>> -> memref<1x16xf32, #tpu.memory_space<any>>
    %c5_i32_16 = arith.constant 5 : i32
    %c0_i32_17 = arith.constant 0 : i32
    %27 = tpu.memref_slice %arg7[%c5_i32_16, %c0_i32_17] : memref<8x16xf32, #tpu.memory_space<vmem>> -> memref<1x16xf32, #tpu.memory_space<vmem>>
    %28 = tpu.memref_slice %arg8[%c5_i32] : memref<8x!tpu.dma_semaphore, #tpu.memory_space<semaphore_mem>> -> memref<1x!tpu.dma_semaphore, #tpu.memory_space<semaphore_mem>>
    %29 = tpu.memref_squeeze %28 : memref<1x!tpu.dma_semaphore, #tpu.memory_space<semaphore_mem>> -> memref<!tpu.dma_semaphore, #tpu.memory_space<semaphore_mem>>
    tpu.enqueue_dma source(%26 : memref<1x16xf32, #tpu.memory_space<any>>) target(%27 : memref<1x16xf32, #tpu.memory_space<vmem>>) target_semaphore(%29 : memref<!tpu.dma_semaphore, #tpu.memory_space<semaphore_mem>>)
    %c6 = arith.constant 6 : index
    %30 = memref.load %arg0[%c6] : memref<8xi32, #tpu.memory_space<smem>>
    %c6_i32 = arith.constant 6 : i32
    %c0_i32_18 = arith.constant 0 : i32
    %31 = tpu.memref_slice %arg5[%30, %c0_i32_18] : memref<24000x16xf32, #tpu.memory_space<any>> -> memref<1x16xf32, #tpu.memory_space<any>>
    %c6_i32_19 = arith.constant 6 : i32
    %c0_i32_20 = arith.constant 0 : i32
    %32 = tpu.memref_slice %arg7[%c6_i32_19, %c0_i32_20] : memref<8x16xf32, #tpu.memory_space<vmem>> -> memref<1x16xf32, #tpu.memory_space<vmem>>
    %33 = tpu.memref_slice %arg8[%c6_i32] : memref<8x!tpu.dma_semaphore, #tpu.memory_space<semaphore_mem>> -> memref<1x!tpu.dma_semaphore, #tpu.memory_space<semaphore_mem>>
    %34 = tpu.memref_squeeze %33 : memref<1x!tpu.dma_semaphore, #tpu.memory_space<semaphore_mem>> -> memref<!tpu.dma_semaphore, #tpu.memory_space<semaphore_mem>>
    tpu.enqueue_dma source(%31 : memref<1x16xf32, #tpu.memory_space<any>>) target(%32 : memref<1x16xf32, #tpu.memory_space<vmem>>) target_semaphore(%34 : memref<!tpu.dma_semaphore, #tpu.memory_space<semaphore_mem>>)
    %c7 = arith.constant 7 : index
    %35 = memref.load %arg0[%c7] : memref<8xi32, #tpu.memory_space<smem>>
    %c7_i32 = arith.constant 7 : i32
    %c0_i32_21 = arith.constant 0 : i32
    %36 = tpu.memref_slice %arg5[%35, %c0_i32_21] : memref<24000x16xf32, #tpu.memory_space<any>> -> memref<1x16xf32, #tpu.memory_space<any>>
    %c7_i32_22 = arith.constant 7 : i32
    %c0_i32_23 = arith.constant 0 : i32
    %37 = tpu.memref_slice %arg7[%c7_i32_22, %c0_i32_23] : memref<8x16xf32, #tpu.memory_space<vmem>> -> memref<1x16xf32, #tpu.memory_space<vmem>>
    %38 = tpu.memref_slice %arg8[%c7_i32] : memref<8x!tpu.dma_semaphore, #tpu.memory_space<semaphore_mem>> -> memref<1x!tpu.dma_semaphore, #tpu.memory_space<semaphore_mem>>
    %39 = tpu.memref_squeeze %38 : memref<1x!tpu.dma_semaphore, #tpu.memory_space<semaphore_mem>> -> memref<!tpu.dma_semaphore, #tpu.memory_space<semaphore_mem>>
    tpu.enqueue_dma source(%36 : memref<1x16xf32, #tpu.memory_space<any>>) target(%37 : memref<1x16xf32, #tpu.memory_space<vmem>>) target_semaphore(%39 : memref<!tpu.dma_semaphore, #tpu.memory_space<semaphore_mem>>)
    %c0_24 = arith.constant 0 : index
    %c0_25 = arith.constant 0 : index
    %40 = vector.load %arg1[%c0_24, %c0_25] : memref<8x2xi32, #tpu.memory_space<vmem>>, vector<8x1xi32>
    %c0_26 = arith.constant 0 : index
    %c1_27 = arith.constant 1 : index
    %41 = vector.load %arg1[%c0_26, %c1_27] : memref<8x2xi32, #tpu.memory_space<vmem>>, vector<8x1xi32>
    %42 = tpu.iota {dimensions = array<i32: 1>} : vector<8x8xi32>
    %43 = vector.broadcast %40 : vector<8x1xi32> to vector<8x8xi32>
    %44 = arith.cmpi eq, %42, %43 : vector<8x8xi32>
    %45 = arith.extui %44 : vector<8x8xi1> to vector<8x8xi32>
    %46 = arith.sitofp %45 : vector<8x8xi32> to vector<8x8xf32>
    %47 = tpu.iota {dimensions = array<i32: 1>} : vector<8x1440xi32>
    %48 = vector.broadcast %41 : vector<8x1xi32> to vector<8x1440xi32>
    %49 = arith.cmpi eq, %47, %48 : vector<8x1440xi32>
    %50 = arith.extui %49 : vector<8x1440xi1> to vector<8x1440xi32>
    %51 = arith.sitofp %50 : vector<8x1440xi32> to vector<8x1440xf32>
    %c0_28 = arith.constant 0 : index
    %c0_29 = arith.constant 0 : index
    %52 = vector.load %arg3[%c0_28, %c0_29] : memref<8x3xf32, #tpu.memory_space<vmem>>, vector<8x3xf32>
    %cst = arith.constant dense<0.000000e+00> : vector<8x3xf32>
    %53 = tpu.matmul %46, %52, %cst {dimension_numbers = #tpu.dot_dimension_numbers<[1], [0], [0], [1], [0, 0, 1, 1], [], []>} : vector<8x8xf32>, vector<8x3xf32>, vector<8x3xf32> -> vector<8x3xf32>
    %c0_30 = arith.constant 0 : index
    %c0_31 = arith.constant 0 : index
    %54 = vector.load %arg4[%c0_30, %c0_31] : memref<1440x8xf32, #tpu.memory_space<vmem>>, vector<1440x8xf32>
    %cst_32 = arith.constant dense<0.000000e+00> : vector<8x8xf32>
    %55 = tpu.matmul %51, %54, %cst_32 {dimension_numbers = #tpu.dot_dimension_numbers<[1], [0], [0], [1], [0, 0, 1, 1], [], []>} : vector<8x1440xf32>, vector<1440x8xf32>, vector<8x8xf32> -> vector<8x8xf32>
    %c0_33 = arith.constant 0 : index
    %c0_34 = arith.constant 0 : index
    %56 = vector.load %arg2[%c0_33, %c0_34] : memref<8x1xf32, #tpu.memory_space<vmem>>, vector<8x1xf32>
    %cst_35 = arith.constant 1.000000e+01 : f32
    %57 = vector.broadcast %cst_35 : f32 to vector<8x1xf32>
    %58 = arith.subf %56, %57 : vector<8x1xf32>
    %cst_36 = arith.constant 5.000000e+00 : f32
    %59 = vector.broadcast %cst_36 : f32 to vector<8x1xf32>
    %60 = arith.divf %58, %59 : vector<8x1xf32>
    %c0_37 = arith.constant 0 : index
    %c16 = arith.constant 16 : index
    %61 = vector.load %arg6[%c0_37, %c16] : memref<8x28xf32, #tpu.memory_space<vmem>>, vector<8x3xf32>
    tpu.vector_store %arg6[%c0_37, %c16], %53 {strides = array<i32>} : memref<8x28xf32, #tpu.memory_space<vmem>>, vector<8x3xf32>,
    %c0_38 = arith.constant 0 : index
    %c19 = arith.constant 19 : index
    %62 = vector.load %arg6[%c0_38, %c19] : memref<8x28xf32, #tpu.memory_space<vmem>>, vector<8x8xf32>
    tpu.vector_store %arg6[%c0_38, %c19], %55 {strides = array<i32>} : memref<8x28xf32, #tpu.memory_space<vmem>>, vector<8x8xf32>,
    %c0_39 = arith.constant 0 : index
    %c27 = arith.constant 27 : index
    %63 = vector.load %arg6[%c0_39, %c27] : memref<8x28xf32, #tpu.memory_space<vmem>>, vector<8x1xf32>
    tpu.vector_store %arg6[%c0_39, %c27], %60 {strides = array<i32>} : memref<8x28xf32, #tpu.memory_space<vmem>>, vector<8x1xf32>,
    %c0_i32_40 = arith.constant 0 : i32
    %c0_i32_41 = arith.constant 0 : i32
    %64 = tpu.memref_slice %arg5[%0, %c0_i32_41] : memref<24000x16xf32, #tpu.memory_space<any>> -> memref<1x16xf32, #tpu.memory_space<any>>
    %c0_i32_42 = arith.constant 0 : i32
    %c0_i32_43 = arith.constant 0 : i32
    %65 = tpu.memref_slice %arg7[%c0_i32_42, %c0_i32_43] : memref<8x16xf32, #tpu.memory_space<vmem>> -> memref<1x16xf32, #tpu.memory_space<vmem>>
    %66 = tpu.memref_slice %arg8[%c0_i32_40] : memref<8x!tpu.dma_semaphore, #tpu.memory_space<semaphore_mem>> -> memref<1x!tpu.dma_semaphore, #tpu.memory_space<semaphore_mem>>
    %67 = tpu.memref_squeeze %66 : memref<1x!tpu.dma_semaphore, #tpu.memory_space<semaphore_mem>> -> memref<!tpu.dma_semaphore, #tpu.memory_space<semaphore_mem>>
    tpu.wait_dma2 semaphore(%67 : memref<!tpu.dma_semaphore, #tpu.memory_space<semaphore_mem>>) src(%64 : memref<1x16xf32, #tpu.memory_space<any>>) dst(%65 : memref<1x16xf32, #tpu.memory_space<vmem>>)
    %c1_i32_44 = arith.constant 1 : i32
    %c0_i32_45 = arith.constant 0 : i32
    %68 = tpu.memref_slice %arg5[%5, %c0_i32_45] : memref<24000x16xf32, #tpu.memory_space<any>> -> memref<1x16xf32, #tpu.memory_space<any>>
    %c1_i32_46 = arith.constant 1 : i32
    %c0_i32_47 = arith.constant 0 : i32
    %69 = tpu.memref_slice %arg7[%c1_i32_46, %c0_i32_47] : memref<8x16xf32, #tpu.memory_space<vmem>> -> memref<1x16xf32, #tpu.memory_space<vmem>>
    %70 = tpu.memref_slice %arg8[%c1_i32_44] : memref<8x!tpu.dma_semaphore, #tpu.memory_space<semaphore_mem>> -> memref<1x!tpu.dma_semaphore, #tpu.memory_space<semaphore_mem>>
    %71 = tpu.memref_squeeze %70 : memref<1x!tpu.dma_semaphore, #tpu.memory_space<semaphore_mem>> -> memref<!tpu.dma_semaphore, #tpu.memory_space<semaphore_mem>>
    tpu.wait_dma2 semaphore(%71 : memref<!tpu.dma_semaphore, #tpu.memory_space<semaphore_mem>>) src(%68 : memref<1x16xf32, #tpu.memory_space<any>>) dst(%69 : memref<1x16xf32, #tpu.memory_space<vmem>>)
    %c2_i32_48 = arith.constant 2 : i32
    %c0_i32_49 = arith.constant 0 : i32
    %72 = tpu.memref_slice %arg5[%10, %c0_i32_49] : memref<24000x16xf32, #tpu.memory_space<any>> -> memref<1x16xf32, #tpu.memory_space<any>>
    %c2_i32_50 = arith.constant 2 : i32
    %c0_i32_51 = arith.constant 0 : i32
    %73 = tpu.memref_slice %arg7[%c2_i32_50, %c0_i32_51] : memref<8x16xf32, #tpu.memory_space<vmem>> -> memref<1x16xf32, #tpu.memory_space<vmem>>
    %74 = tpu.memref_slice %arg8[%c2_i32_48] : memref<8x!tpu.dma_semaphore, #tpu.memory_space<semaphore_mem>> -> memref<1x!tpu.dma_semaphore, #tpu.memory_space<semaphore_mem>>
    %75 = tpu.memref_squeeze %74 : memref<1x!tpu.dma_semaphore, #tpu.memory_space<semaphore_mem>> -> memref<!tpu.dma_semaphore, #tpu.memory_space<semaphore_mem>>
    tpu.wait_dma2 semaphore(%75 : memref<!tpu.dma_semaphore, #tpu.memory_space<semaphore_mem>>) src(%72 : memref<1x16xf32, #tpu.memory_space<any>>) dst(%73 : memref<1x16xf32, #tpu.memory_space<vmem>>)
    %c3_i32_52 = arith.constant 3 : i32
    %c0_i32_53 = arith.constant 0 : i32
    %76 = tpu.memref_slice %arg5[%15, %c0_i32_53] : memref<24000x16xf32, #tpu.memory_space<any>> -> memref<1x16xf32, #tpu.memory_space<any>>
    %c3_i32_54 = arith.constant 3 : i32
    %c0_i32_55 = arith.constant 0 : i32
    %77 = tpu.memref_slice %arg7[%c3_i32_54, %c0_i32_55] : memref<8x16xf32, #tpu.memory_space<vmem>> -> memref<1x16xf32, #tpu.memory_space<vmem>>
    %78 = tpu.memref_slice %arg8[%c3_i32_52] : memref<8x!tpu.dma_semaphore, #tpu.memory_space<semaphore_mem>> -> memref<1x!tpu.dma_semaphore, #tpu.memory_space<semaphore_mem>>
    %79 = tpu.memref_squeeze %78 : memref<1x!tpu.dma_semaphore, #tpu.memory_space<semaphore_mem>> -> memref<!tpu.dma_semaphore, #tpu.memory_space<semaphore_mem>>
    tpu.wait_dma2 semaphore(%79 : memref<!tpu.dma_semaphore, #tpu.memory_space<semaphore_mem>>) src(%76 : memref<1x16xf32, #tpu.memory_space<any>>) dst(%77 : memref<1x16xf32, #tpu.memory_space<vmem>>)
    %c4_i32_56 = arith.constant 4 : i32
    %c0_i32_57 = arith.constant 0 : i32
    %80 = tpu.memref_slice %arg5[%20, %c0_i32_57] : memref<24000x16xf32, #tpu.memory_space<any>> -> memref<1x16xf32, #tpu.memory_space<any>>
    %c4_i32_58 = arith.constant 4 : i32
    %c0_i32_59 = arith.constant 0 : i32
    %81 = tpu.memref_slice %arg7[%c4_i32_58, %c0_i32_59] : memref<8x16xf32, #tpu.memory_space<vmem>> -> memref<1x16xf32, #tpu.memory_space<vmem>>
    %82 = tpu.memref_slice %arg8[%c4_i32_56] : memref<8x!tpu.dma_semaphore, #tpu.memory_space<semaphore_mem>> -> memref<1x!tpu.dma_semaphore, #tpu.memory_space<semaphore_mem>>
    %83 = tpu.memref_squeeze %82 : memref<1x!tpu.dma_semaphore, #tpu.memory_space<semaphore_mem>> -> memref<!tpu.dma_semaphore, #tpu.memory_space<semaphore_mem>>
    tpu.wait_dma2 semaphore(%83 : memref<!tpu.dma_semaphore, #tpu.memory_space<semaphore_mem>>) src(%80 : memref<1x16xf32, #tpu.memory_space<any>>) dst(%81 : memref<1x16xf32, #tpu.memory_space<vmem>>)
    %c5_i32_60 = arith.constant 5 : i32
    %c0_i32_61 = arith.constant 0 : i32
    %84 = tpu.memref_slice %arg5[%25, %c0_i32_61] : memref<24000x16xf32, #tpu.memory_space<any>> -> memref<1x16xf32, #tpu.memory_space<any>>
    %c5_i32_62 = arith.constant 5 : i32
    %c0_i32_63 = arith.constant 0 : i32
    %85 = tpu.memref_slice %arg7[%c5_i32_62, %c0_i32_63] : memref<8x16xf32, #tpu.memory_space<vmem>> -> memref<1x16xf32, #tpu.memory_space<vmem>>
    %86 = tpu.memref_slice %arg8[%c5_i32_60] : memref<8x!tpu.dma_semaphore, #tpu.memory_space<semaphore_mem>> -> memref<1x!tpu.dma_semaphore, #tpu.memory_space<semaphore_mem>>
    %87 = tpu.memref_squeeze %86 : memref<1x!tpu.dma_semaphore, #tpu.memory_space<semaphore_mem>> -> memref<!tpu.dma_semaphore, #tpu.memory_space<semaphore_mem>>
    tpu.wait_dma2 semaphore(%87 : memref<!tpu.dma_semaphore, #tpu.memory_space<semaphore_mem>>) src(%84 : memref<1x16xf32, #tpu.memory_space<any>>) dst(%85 : memref<1x16xf32, #tpu.memory_space<vmem>>)
    %c6_i32_64 = arith.constant 6 : i32
    %c0_i32_65 = arith.constant 0 : i32
    %88 = tpu.memref_slice %arg5[%30, %c0_i32_65] : memref<24000x16xf32, #tpu.memory_space<any>> -> memref<1x16xf32, #tpu.memory_space<any>>
    %c6_i32_66 = arith.constant 6 : i32
    %c0_i32_67 = arith.constant 0 : i32
    %89 = tpu.memref_slice %arg7[%c6_i32_66, %c0_i32_67] : memref<8x16xf32, #tpu.memory_space<vmem>> -> memref<1x16xf32, #tpu.memory_space<vmem>>
    %90 = tpu.memref_slice %arg8[%c6_i32_64] : memref<8x!tpu.dma_semaphore, #tpu.memory_space<semaphore_mem>> -> memref<1x!tpu.dma_semaphore, #tpu.memory_space<semaphore_mem>>
    %91 = tpu.memref_squeeze %90 : memref<1x!tpu.dma_semaphore, #tpu.memory_space<semaphore_mem>> -> memref<!tpu.dma_semaphore, #tpu.memory_space<semaphore_mem>>
    tpu.wait_dma2 semaphore(%91 : memref<!tpu.dma_semaphore, #tpu.memory_space<semaphore_mem>>) src(%88 : memref<1x16xf32, #tpu.memory_space<any>>) dst(%89 : memref<1x16xf32, #tpu.memory_space<vmem>>)
    %c7_i32_68 = arith.constant 7 : i32
    %c0_i32_69 = arith.constant 0 : i32
    %92 = tpu.memref_slice %arg5[%35, %c0_i32_69] : memref<24000x16xf32, #tpu.memory_space<any>> -> memref<1x16xf32, #tpu.memory_space<any>>
    %c7_i32_70 = arith.constant 7 : i32
    %c0_i32_71 = arith.constant 0 : i32
    %93 = tpu.memref_slice %arg7[%c7_i32_70, %c0_i32_71] : memref<8x16xf32, #tpu.memory_space<vmem>> -> memref<1x16xf32, #tpu.memory_space<vmem>>
    %94 = tpu.memref_slice %arg8[%c7_i32_68] : memref<8x!tpu.dma_semaphore, #tpu.memory_space<semaphore_mem>> -> memref<1x!tpu.dma_semaphore, #tpu.memory_space<semaphore_mem>>
    %95 = tpu.memref_squeeze %94 : memref<1x!tpu.dma_semaphore, #tpu.memory_space<semaphore_mem>> -> memref<!tpu.dma_semaphore, #tpu.memory_space<semaphore_mem>>
    tpu.wait_dma2 semaphore(%95 : memref<!tpu.dma_semaphore, #tpu.memory_space<semaphore_mem>>) src(%92 : memref<1x16xf32, #tpu.memory_space<any>>) dst(%93 : memref<1x16xf32, #tpu.memory_space<vmem>>)
    %c0_72 = arith.constant 0 : index
    %c0_73 = arith.constant 0 : index
    %96 = vector.load %arg7[%c0_72, %c0_73] : memref<8x16xf32, #tpu.memory_space<vmem>>, vector<8x16xf32>
    %c0_74 = arith.constant 0 : index
    %c0_75 = arith.constant 0 : index
    %97 = vector.load %arg6[%c0_74, %c0_75] : memref<8x28xf32, #tpu.memory_space<vmem>>, vector<8x16xf32>
    tpu.vector_store %arg6[%c0_74, %c0_75], %96 {strides = array<i32>} : memref<8x28xf32, #tpu.memory_space<vmem>>, vector<8x16xf32>,
    return
  }
}

</mosaic_0001>

<llo_original>
// kernel: tpu_custom_call.1
$region0: #{tpu_custom_call.1}
  #allocation0 [shape = 'u32[]', space=smem, size = 0x4, offset = 0x4, fixed_abs, tag = 'smem constant byte address 0x4 - core index']
  #allocation1 [shape = 'u32[72,128]{1,0:T(1,128)}', space=vmem, size = 0x9000, scoped, tag = 'internal scratch']
  #allocation2 [shape = 'f32[8,16]{1,0:T(8,128)}', space=vmem, size = 0x1000, scoped, tag = 'scratch operand']
  #allocation3 [shape = 's32[8]{0}', space=sflag, size = 0x20, scoped, tag = 'scratch operand']
  #allocation8 [shape = 's32[]', space=sflag, size = 0x4, offset = 0, fixed_abs, tag = 'sflag constant byte address 0x0 - dummy sync flag']
  #allocation9 [shape = 's32[]', space=sflag, size = 0x4, offset = 0, fixed_abs, tag = 'sflag constant byte address 0x0 - dummy sync flag']
  #allocation10 [shape = 's32[]', space=sflag, size = 0x4, offset = 0, fixed_abs, tag = 'sflag constant byte address 0x0 - dummy sync flag']
  #allocation11 [shape = 's32[]', space=sflag, size = 0x4, offset = 0, fixed_abs, tag = 'sflag constant byte address 0x0 - dummy sync flag']
  #allocation12 [shape = 's32[]', space=sflag, size = 0x4, offset = 0, fixed_abs, tag = 'sflag constant byte address 0x0 - dummy sync flag']
  #allocation13 [shape = 's32[]', space=sflag, size = 0x4, offset = 0, fixed_abs, tag = 'sflag constant byte address 0x0 - dummy sync flag']
  #allocation14 [shape = 's32[]', space=sflag, size = 0x4, offset = 0, fixed_abs, tag = 'sflag constant byte address 0x0 - dummy sync flag']
  #allocation15 [shape = 's32[]', space=sflag, size = 0x4, offset = 0, fixed_abs, tag = 'sflag constant byte address 0x0 - dummy sync flag']
  %s0 = inlined_call_operand.vmem [shape: s32[8], index: 0, kind: input, shape index: {}]
  %s1 = inlined_call_operand.vmem [shape: s32[8,2], index: 1, kind: input, shape index: {}]
  %s2 = inlined_call_operand.vmem [shape: f32[8,1], index: 2, kind: input, shape index: {}]
  %s3 = inlined_call_operand.vmem [shape: f32[8,3], index: 3, kind: input, shape index: {}]
  %s4 = inlined_call_operand.vmem [shape: f32[1440,8], index: 4, kind: input, shape index: {}]
  %s5 = inlined_call_operand.vmem [shape: f32[24000,16], index: 5, kind: input, shape index: {}]
  %s6 = inlined_call_operand.hbm [shape: f32[8,28], index: 6, kind: output, shape index: {}]
  %s7 = sld [smem:[#allocation0]]
  $region274: #{tpu_custom_call.1} parent=0
    _
  %s9 = ssub.s32 1, %s7
  %s10 = scalar_select 0, %s9, %s7
  $region1: #{tpu_custom_call.1} parent=0
    #allocation4 [shape = 'u8[512]{0}', space=smem, size = 0x200, scoped, tag = 'input window, operand 0, single buffered']
    #allocation5 [shape = 's32[1]{0}', space=sflag, size = 0x4, scoped, tag = 'scoped memory for tpu_custom_call.1']
    #allocation6 [shape = 's32[1]{0}', space=sflag, size = 0x4, scoped, tag = 'scoped memory for tpu_custom_call.1']
    #allocation7 [shape = 'u8[4096]{0}', space=vmem, size = 0x1000, scoped, tag = 'output window, operand 0, single buffered']
    %11 = vsyncpa [#allocation6], 0
    %12 = vsyncpa [#allocation5], 0
    // Predicated region
    $region2: #{tpu_custom_call.1} parent=1 // pred_check
      _
    $region3: #{tpu_custom_call.1} parent=1 // pred_check_branch
      %14 = sbr.rel (0) target = $region5
    $region4: #{tpu_custom_call.1} parent=1 // pred_region
      %16 = vsyncadd [#allocation6], 0
      %s18 = sshll.u32 %s0, 4
      %s19 = int_to_ptr.vmem [resolvable:$true] %s18
      %21 = dma.vmem_to_smem %s19, 16, [#allocation4], [#allocation6]
    $region5: #{tpu_custom_call.1} parent=1 // pred_fallthru
      _
    // Predicated region
    $region6: #{tpu_custom_call.1} parent=1 // pred_check
      _
    $region7: #{tpu_custom_call.1} parent=1 // pred_check_branch
      %23 = sbr.rel (0) target = $region9
    $region8: #{tpu_custom_call.1} parent=1 // pred_region
      _
    $region9: #{tpu_custom_call.1} parent=1 // pred_fallthru
      _
    // Predicated region
    $region10: #{tpu_custom_call.1} parent=1 // pred_check
      _
    $region11: #{tpu_custom_call.1} parent=1 // pred_check_branch
      %25 = sbr.rel (0) target = $region13
    $region12: #{tpu_custom_call.1} parent=1 // pred_region
      _
    $region13: #{tpu_custom_call.1} parent=1 // pred_fallthru
      _
    // Predicated region
    $region14: #{tpu_custom_call.1} parent=1 // pred_check
      _
    $region15: #{tpu_custom_call.1} parent=1 // pred_check_branch
      %27 = sbr.rel (0) target = $region17
    $region16: #{tpu_custom_call.1} parent=1 // pred_region
      _
    $region17: #{tpu_custom_call.1} parent=1 // pred_fallthru
      _
    // Predicated region
    $region18: #{tpu_custom_call.1} parent=1 // pred_check
      _
    $region19: #{tpu_custom_call.1} parent=1 // pred_check_branch
      %29 = sbr.rel (0) target = $region21
    $region20: #{tpu_custom_call.1} parent=1 // pred_region
      _
    $region21: #{tpu_custom_call.1} parent=1 // pred_fallthru
      _
    // Predicated region
    $region22: #{tpu_custom_call.1} parent=1 // pred_check
      _
    $region23: #{tpu_custom_call.1} parent=1 // pred_check_branch
      %31 = sbr.rel (0) target = $region25
    $region24: #{tpu_custom_call.1} parent=1 // pred_region
      %33 = dma.done [#allocation6], 16
    $region25: #{tpu_custom_call.1} parent=1 // pred_fallthru
      _
    %34 = sfence
    %s35 = sld [smem:[#allocation4]]
    %s36 = scalar_lea.vmem %s5, %s35
    // Predicated region
    $region26: #{tpu_custom_call.1} parent=1 // pred_check
      _
    $region27: #{tpu_custom_call.1} parent=1 // pred_check_branch
      %38 = sbr.rel target = $region29
    $region28: #{tpu_custom_call.1} parent=1 // pred_region
      // Predicated region
      $region41: #{tpu_custom_call.1} parent=28 // pred_check
        _
      $region42: #{tpu_custom_call.1} parent=28 // pred_check_branch
        %54 = sbr.rel (0) target = $region44
      $region43: #{tpu_custom_call.1} parent=28 // pred_region
        %s56 = ssub.s32 2, 1
        loop: start=0, step=1, limit=1
        $region45: #{tpu_custom_call.1} parent=43 // loop_pre_header
          _
        $region46: #{tpu_custom_call.1} parent=43 // loop_header
          %s58 = sphi 0, %s62
          %p59 = scmp.ge.s32.totalorder %s58, 1
          %s63 = sphi %s36, %s36
          %s64 = sphi [#allocation2], [#allocation2]
        $region47: #{tpu_custom_call.1} parent=43 // loop_header_branch
          %61 = sbr.rel (%p59) target = $region51
        $region48: #{tpu_custom_call.1} parent=43 // loop_body
          %v65 = vld [vmem:[%s63] sm:%s56]
          %66 = vst [vmem:[%s64] sm:%s56] %v65
        $region49: #{tpu_custom_call.1} parent=43 // loop_footer
          %s62 = sadd.s32 1, %s58
        $region50: #{tpu_custom_call.1} parent=43 // loop_footer_branch
          %57 = sbr.rel target = $region46
        $region51: #{tpu_custom_call.1} parent=43 // loop_exit
          _
      $region44: #{tpu_custom_call.1} parent=28 // pred_fallthru
        _
    $region29: #{tpu_custom_call.1} parent=1 // pred_fallthru
      _
    // Predicated region
    $region30: #{tpu_custom_call.1} parent=1 // pred_check
      _
    $region31: #{tpu_custom_call.1} parent=1 // pred_check_branch
      %40 = sbr.rel (0) target = $region33
    $region32: #{tpu_custom_call.1} parent=1 // pred_region
      %s42 = ssub.s32 2, 1
      loop: start=0, step=1, limit=1
      $region34: #{tpu_custom_call.1} parent=32 // loop_pre_header
        _
      $region35: #{tpu_custom_call.1} parent=32 // loop_header
        %s44 = sphi 0, %s48
        %p45 = scmp.ge.s32.totalorder %s44, 1
        %s49 = sphi %s36, %s36
        %s50 = sphi [#allocation2], [#allocation2]
      $region36: #{tpu_custom_call.1} parent=32 // loop_header_branch
        %47 = sbr.rel (%p45) target = $region40
      $region37: #{tpu_custom_call.1} parent=32 // loop_body
        %v51 = vld [vmem:[%s49] sm:%s42]
        %52 = vst [vmem:[%s50] sm:%s42] %v51
      $region38: #{tpu_custom_call.1} parent=32 // loop_footer
        %s48 = sadd.s32 1, %s44
      $region39: #{tpu_custom_call.1} parent=32 // loop_footer_branch
        %43 = sbr.rel target = $region35
      $region40: #{tpu_custom_call.1} parent=32 // loop_exit
        _
    $region33: #{tpu_custom_call.1} parent=1 // pred_fallthru
      _
    // Predicated region
    $region52: #{tpu_custom_call.1} parent=1 // pred_check
      _
    $region53: #{tpu_custom_call.1} parent=1 // pred_check_branch
      %69 = sbr.rel (0) target = $region55
    $region54: #{tpu_custom_call.1} parent=1 // pred_region
      %70 = vsyncadd [#allocation3], 16
    $region55: #{tpu_custom_call.1} parent=1 // pred_fallthru
      _
    %s71 = sld [smem:[#allocation4 + $0x1]]
    %s72 = scalar_lea.vmem %s5, %s71
    %s73 = scalar_lea.vmem [#allocation2], 1
    %s74 = scalar_lea.sflag [#allocation3], 1
    // Predicated region
    $region56: #{tpu_custom_call.1} parent=1 // pred_check
      _
    $region57: #{tpu_custom_call.1} parent=1 // pred_check_branch
      %76 = sbr.rel target = $region59
    $region58: #{tpu_custom_call.1} parent=1 // pred_region
      // Predicated region
      $region71: #{tpu_custom_call.1} parent=58 // pred_check
        _
      $region72: #{tpu_custom_call.1} parent=58 // pred_check_branch
        %92 = sbr.rel (0) target = $region74
      $region73: #{tpu_custom_call.1} parent=58 // pred_region
        %s94 = ssub.s32 2, 1
        loop: start=0, step=1, limit=1
        $region75: #{tpu_custom_call.1} parent=73 // loop_pre_header
          _
        $region76: #{tpu_custom_call.1} parent=73 // loop_header
          %s96 = sphi 0, %s100
          %p97 = scmp.ge.s32.totalorder %s96, 1
          %s101 = sphi %s72, %s72
          %s102 = sphi %s73, %s73
        $region77: #{tpu_custom_call.1} parent=73 // loop_header_branch
          %99 = sbr.rel (%p97) target = $region81
        $region78: #{tpu_custom_call.1} parent=73 // loop_body
          %v103 = vld [vmem:[%s101] sm:%s94]
          %104 = vst [vmem:[%s102] sm:%s94] %v103
        $region79: #{tpu_custom_call.1} parent=73 // loop_footer
          %s100 = sadd.s32 1, %s96
        $region80: #{tpu_custom_call.1} parent=73 // loop_footer_branch
          %95 = sbr.rel target = $region76
        $region81: #{tpu_custom_call.1} parent=73 // loop_exit
          _
      $region74: #{tpu_custom_call.1} parent=58 // pred_fallthru
        _
    $region59: #{tpu_custom_call.1} parent=1 // pred_fallthru
      _
    // Predicated region
    $region60: #{tpu_custom_call.1} parent=1 // pred_check
      _
    $region61: #{tpu_custom_call.1} parent=1 // pred_check_branch
      %78 = sbr.rel (0) target = $region63
    $region62: #{tpu_custom_call.1} parent=1 // pred_region
      %s80 = ssub.s32 2, 1
      loop: start=0, step=1, limit=1
      $region64: #{tpu_custom_call.1} parent=62 // loop_pre_header
        _
      $region65: #{tpu_custom_call.1} parent=62 // loop_header
        %s82 = sphi 0, %s86
        %p83 = scmp.ge.s32.totalorder %s82, 1
        %s87 = sphi %s72, %s72
        %s88 = sphi %s73, %s73
      $region66: #{tpu_custom_call.1} parent=62 // loop_header_branch
        %85 = sbr.rel (%p83) target = $region70
      $region67: #{tpu_custom_call.1} parent=62 // loop_body
        %v89 = vld [vmem:[%s87] sm:%s80]
        %90 = vst [vmem:[%s88] sm:%s80] %v89
      $region68: #{tpu_custom_call.1} parent=62 // loop_footer
        %s86 = sadd.s32 1, %s82
      $region69: #{tpu_custom_call.1} parent=62 // loop_footer_branch
        %81 = sbr.rel target = $region65
      $region70: #{tpu_custom_call.1} parent=62 // loop_exit
        _
    $region63: #{tpu_custom_call.1} parent=1 // pred_fallthru
      _
    // Predicated region
    $region82: #{tpu_custom_call.1} parent=1 // pred_check
      _
    $region83: #{tpu_custom_call.1} parent=1 // pred_check_branch
      %107 = sbr.rel (0) target = $region85
    $region84: #{tpu_custom_call.1} parent=1 // pred_region
      %108 = vsyncadd %s74, 16
    $region85: #{tpu_custom_call.1} parent=1 // pred_fallthru
      _
    %s109 = sld [smem:[#allocation4 + $0x2]]
    %s110 = scalar_lea.vmem %s5, %s109
    %s111 = scalar_lea.vmem [#allocation2], 2
    %s112 = scalar_lea.sflag [#allocation3], 2
    // Predicated region
    $region86: #{tpu_custom_call.1} parent=1 // pred_check
      _
    $region87: #{tpu_custom_call.1} parent=1 // pred_check_branch
      %114 = sbr.rel target = $region89
    $region88: #{tpu_custom_call.1} parent=1 // pred_region
      // Predicated region
      $region101: #{tpu_custom_call.1} parent=88 // pred_check
        _
      $region102: #{tpu_custom_call.1} parent=88 // pred_check_branch
        %130 = sbr.rel (0) target = $region104
      $region103: #{tpu_custom_call.1} parent=88 // pred_region
        %s132 = ssub.s32 2, 1
        loop: start=0, step=1, limit=1
        $region105: #{tpu_custom_call.1} parent=103 // loop_pre_header
          _
        $region106: #{tpu_custom_call.1} parent=103 // loop_header
          %s134 = sphi 0, %s138
          %p135 = scmp.ge.s32.totalorder %s134, 1
          %s139 = sphi %s110, %s110
          %s140 = sphi %s111, %s111
        $region107: #{tpu_custom_call.1} parent=103 // loop_header_branch
          %137 = sbr.rel (%p135) target = $region111
        $region108: #{tpu_custom_call.1} parent=103 // loop_body
          %v141 = vld [vmem:[%s139] sm:%s132]
          %142 = vst [vmem:[%s140] sm:%s132] %v141
        $region109: #{tpu_custom_call.1} parent=103 // loop_footer
          %s138 = sadd.s32 1, %s134
        $region110: #{tpu_custom_call.1} parent=103 // loop_footer_branch
          %133 = sbr.rel target = $region106
        $region111: #{tpu_custom_call.1} parent=103 // loop_exit
          _
      $region104: #{tpu_custom_call.1} parent=88 // pred_fallthru
        _
    $region89: #{tpu_custom_call.1} parent=1 // pred_fallthru
      _
    // Predicated region
    $region90: #{tpu_custom_call.1} parent=1 // pred_check
      _
    $region91: #{tpu_custom_call.1} parent=1 // pred_check_branch
      %116 = sbr.rel (0) target = $region93
    $region92: #{tpu_custom_call.1} parent=1 // pred_region
      %s118 = ssub.s32 2, 1
      loop: start=0, step=1, limit=1
      $region94: #{tpu_custom_call.1} parent=92 // loop_pre_header
        _
      $region95: #{tpu_custom_call.1} parent=92 // loop_header
        %s120 = sphi 0, %s124
        %p121 = scmp.ge.s32.totalorder %s120, 1
        %s125 = sphi %s110, %s110
        %s126 = sphi %s111, %s111
      $region96: #{tpu_custom_call.1} parent=92 // loop_header_branch
        %123 = sbr.rel (%p121) target = $region100
      $region97: #{tpu_custom_call.1} parent=92 // loop_body
        %v127 = vld [vmem:[%s125] sm:%s118]
        %128 = vst [vmem:[%s126] sm:%s118] %v127
      $region98: #{tpu_custom_call.1} parent=92 // loop_footer
        %s124 = sadd.s32 1, %s120
      $region99: #{tpu_custom_call.1} parent=92 // loop_footer_branch
        %119 = sbr.rel target = $region95
      $region100: #{tpu_custom_call.1} parent=92 // loop_exit
        _
    $region93: #{tpu_custom_call.1} parent=1 // pred_fallthru
      _
    // Predicated region
    $region112: #{tpu_custom_call.1} parent=1 // pred_check
      _
    $region113: #{tpu_custom_call.1} parent=1 // pred_check_branch
      %145 = sbr.rel (0) target = $region115
    $region114: #{tpu_custom_call.1} parent=1 // pred_region
      %146 = vsyncadd %s112, 16
    $region115: #{tpu_custom_call.1} parent=1 // pred_fallthru
      _
    %s147 = sld [smem:[#allocation4 + $0x3]]
    %s148 = scalar_lea.vmem %s5, %s147
    %s149 = scalar_lea.vmem [#allocation2], 3
    %s150 = scalar_lea.sflag [#allocation3], 3
    // Predicated region
    $region116: #{tpu_custom_call.1} parent=1 // pred_check
      _
    $region117: #{tpu_custom_call.1} parent=1 // pred_check_branch
      %152 = sbr.rel target = $region119
    $region118: #{tpu_custom_call.1} parent=1 // pred_region
      // Predicated region
      $region131: #{tpu_custom_call.1} parent=118 // pred_check
        _
      $region132: #{tpu_custom_call.1} parent=118 // pred_check_branch
        %168 = sbr.rel (0) target = $region134
      $region133: #{tpu_custom_call.1} parent=118 // pred_region
        %s170 = ssub.s32 2, 1
        loop: start=0, step=1, limit=1
        $region135: #{tpu_custom_call.1} parent=133 // loop_pre_header
          _
        $region136: #{tpu_custom_call.1} parent=133 // loop_header
          %s172 = sphi 0, %s176
          %p173 = scmp.ge.s32.totalorder %s172, 1
          %s177 = sphi %s148, %s148
          %s178 = sphi %s149, %s149
        $region137: #{tpu_custom_call.1} parent=133 // loop_header_branch
          %175 = sbr.rel (%p173) target = $region141
        $region138: #{tpu_custom_call.1} parent=133 // loop_body
          %v179 = vld [vmem:[%s177] sm:%s170]
          %180 = vst [vmem:[%s178] sm:%s170] %v179
        $region139: #{tpu_custom_call.1} parent=133 // loop_footer
          %s176 = sadd.s32 1, %s172
        $region140: #{tpu_custom_call.1} parent=133 // loop_footer_branch
          %171 = sbr.rel target = $region136
        $region141: #{tpu_custom_call.1} parent=133 // loop_exit
          _
      $region134: #{tpu_custom_call.1} parent=118 // pred_fallthru
        _
    $region119: #{tpu_custom_call.1} parent=1 // pred_fallthru
      _
    // Predicated region
    $region120: #{tpu_custom_call.1} parent=1 // pred_check
      _
    $region121: #{tpu_custom_call.1} parent=1 // pred_check_branch
      %154 = sbr.rel (0) target = $region123
    $region122: #{tpu_custom_call.1} parent=1 // pred_region
      %s156 = ssub.s32 2, 1
      loop: start=0, step=1, limit=1
      $region124: #{tpu_custom_call.1} parent=122 // loop_pre_header
        _
      $region125: #{tpu_custom_call.1} parent=122 // loop_header
        %s158 = sphi 0, %s162
        %p159 = scmp.ge.s32.totalorder %s158, 1
        %s163 = sphi %s148, %s148
        %s164 = sphi %s149, %s149
      $region126: #{tpu_custom_call.1} parent=122 // loop_header_branch
        %161 = sbr.rel (%p159) target = $region130
      $region127: #{tpu_custom_call.1} parent=122 // loop_body
        %v165 = vld [vmem:[%s163] sm:%s156]
        %166 = vst [vmem:[%s164] sm:%s156] %v165
      $region128: #{tpu_custom_call.1} parent=122 // loop_footer
        %s162 = sadd.s32 1, %s158
      $region129: #{tpu_custom_call.1} parent=122 // loop_footer_branch
        %157 = sbr.rel target = $region125
      $region130: #{tpu_custom_call.1} parent=122 // loop_exit
        _
    $region123: #{tpu_custom_call.1} parent=1 // pred_fallthru
      _
    // Predicated region
    $region142: #{tpu_custom_call.1} parent=1 // pred_check
      _
    $region143: #{tpu_custom_call.1} parent=1 // pred_check_branch
      %183 = sbr.rel (0) target = $region145
    $region144: #{tpu_custom_call.1} parent=1 // pred_region
      %184 = vsyncadd %s150, 16
    $region145: #{tpu_custom_call.1} parent=1 // pred_fallthru
      _
    %s185 = sld [smem:[#allocation4 + $0x4]]
    %s186 = scalar_lea.vmem %s5, %s185
    %s187 = scalar_lea.vmem [#allocation2], 4
    %s188 = scalar_lea.sflag [#allocation3], 4
    // Predicated region
    $region146: #{tpu_custom_call.1} parent=1 // pred_check
      _
    $region147: #{tpu_custom_call.1} parent=1 // pred_check_branch
      %190 = sbr.rel target = $region149
    $region148: #{tpu_custom_call.1} parent=1 // pred_region
      // Predicated region
      $region161: #{tpu_custom_call.1} parent=148 // pred_check
        _
      $region162: #{tpu_custom_call.1} parent=148 // pred_check_branch
        %206 = sbr.rel (0) target = $region164
      $region163: #{tpu_custom_call.1} parent=148 // pred_region
        %s208 = ssub.s32 2, 1
        loop: start=0, step=1, limit=1
        $region165: #{tpu_custom_call.1} parent=163 // loop_pre_header
          _
        $region166: #{tpu_custom_call.1} parent=163 // loop_header
          %s210 = sphi 0, %s214
          %p211 = scmp.ge.s32.totalorder %s210, 1
          %s215 = sphi %s186, %s186
          %s216 = sphi %s187, %s187
        $region167: #{tpu_custom_call.1} parent=163 // loop_header_branch
          %213 = sbr.rel (%p211) target = $region171
        $region168: #{tpu_custom_call.1} parent=163 // loop_body
          %v217 = vld [vmem:[%s215] sm:%s208]
          %218 = vst [vmem:[%s216] sm:%s208] %v217
        $region169: #{tpu_custom_call.1} parent=163 // loop_footer
          %s214 = sadd.s32 1, %s210
        $region170: #{tpu_custom_call.1} parent=163 // loop_footer_branch
          %209 = sbr.rel target = $region166
        $region171: #{tpu_custom_call.1} parent=163 // loop_exit
          _
      $region164: #{tpu_custom_call.1} parent=148 // pred_fallthru
        _
    $region149: #{tpu_custom_call.1} parent=1 // pred_fallthru
      _
    // Predicated region
    $region150: #{tpu_custom_call.1} parent=1 // pred_check
      _
    $region151: #{tpu_custom_call.1} parent=1 // pred_check_branch
      %192 = sbr.rel (0) target = $region153
    $region152: #{tpu_custom_call.1} parent=1 // pred_region
      %s194 = ssub.s32 2, 1
      loop: start=0, step=1, limit=1
      $region154: #{tpu_custom_call.1} parent=152 // loop_pre_header
        _
      $region155: #{tpu_custom_call.1} parent=152 // loop_header
        %s196 = sphi 0, %s200
        %p197 = scmp.ge.s32.totalorder %s196, 1
        %s201 = sphi %s186, %s186
        %s202 = sphi %s187, %s187
      $region156: #{tpu_custom_call.1} parent=152 // loop_header_branch
        %199 = sbr.rel (%p197) target = $region160
      $region157: #{tpu_custom_call.1} parent=152 // loop_body
        %v203 = vld [vmem:[%s201] sm:%s194]
        %204 = vst [vmem:[%s202] sm:%s194] %v203
      $region158: #{tpu_custom_call.1} parent=152 // loop_footer
        %s200 = sadd.s32 1, %s196
      $region159: #{tpu_custom_call.1} parent=152 // loop_footer_branch
        %195 = sbr.rel target = $region155
      $region160: #{tpu_custom_call.1} parent=152 // loop_exit
        _
    $region153: #{tpu_custom_call.1} parent=1 // pred_fallthru
      _
    // Predicated region
    $region172: #{tpu_custom_call.1} parent=1 // pred_check
      _
    $region173: #{tpu_custom_call.1} parent=1 // pred_check_branch
      %221 = sbr.rel (0) target = $region175
    $region174: #{tpu_custom_call.1} parent=1 // pred_region
      %222 = vsyncadd %s188, 16
    $region175: #{tpu_custom_call.1} parent=1 // pred_fallthru
      _
    %s223 = sld [smem:[#allocation4 + $0x5]]
    %s224 = scalar_lea.vmem %s5, %s223
    %s225 = scalar_lea.vmem [#allocation2], 5
    %s226 = scalar_lea.sflag [#allocation3], 5
    // Predicated region
    $region176: #{tpu_custom_call.1} parent=1 // pred_check
      _
    $region177: #{tpu_custom_call.1} parent=1 // pred_check_branch
      %228 = sbr.rel target = $region179
    $region178: #{tpu_custom_call.1} parent=1 // pred_region
      // Predicated region
      $region191: #{tpu_custom_call.1} parent=178 // pred_check
        _
      $region192: #{tpu_custom_call.1} parent=178 // pred_check_branch
        %244 = sbr.rel (0) target = $region194
      $region193: #{tpu_custom_call.1} parent=178 // pred_region
        %s246 = ssub.s32 2, 1
        loop: start=0, step=1, limit=1
        $region195: #{tpu_custom_call.1} parent=193 // loop_pre_header
          _
        $region196: #{tpu_custom_call.1} parent=193 // loop_header
          %s248 = sphi 0, %s252
          %p249 = scmp.ge.s32.totalorder %s248, 1
          %s253 = sphi %s224, %s224
          %s254 = sphi %s225, %s225
        $region197: #{tpu_custom_call.1} parent=193 // loop_header_branch
          %251 = sbr.rel (%p249) target = $region201
        $region198: #{tpu_custom_call.1} parent=193 // loop_body
          %v255 = vld [vmem:[%s253] sm:%s246]
          %256 = vst [vmem:[%s254] sm:%s246] %v255
        $region199: #{tpu_custom_call.1} parent=193 // loop_footer
          %s252 = sadd.s32 1, %s248
        $region200: #{tpu_custom_call.1} parent=193 // loop_footer_branch
          %247 = sbr.rel target = $region196
        $region201: #{tpu_custom_call.1} parent=193 // loop_exit
          _
      $region194: #{tpu_custom_call.1} parent=178 // pred_fallthru
        _
    $region179: #{tpu_custom_call.1} parent=1 // pred_fallthru
      _
    // Predicated region
    $region180: #{tpu_custom_call.1} parent=1 // pred_check
      _
    $region181: #{tpu_custom_call.1} parent=1 // pred_check_branch
      %230 = sbr.rel (0) target = $region183
    $region182: #{tpu_custom_call.1} parent=1 // pred_region
      %s232 = ssub.s32 2, 1
      loop: start=0, step=1, limit=1
      $region184: #{tpu_custom_call.1} parent=182 // loop_pre_header
        _
      $region185: #{tpu_custom_call.1} parent=182 // loop_header
        %s234 = sphi 0, %s238
        %p235 = scmp.ge.s32.totalorder %s234, 1
        %s239 = sphi %s224, %s224
        %s240 = sphi %s225, %s225
      $region186: #{tpu_custom_call.1} parent=182 // loop_header_branch
        %237 = sbr.rel (%p235) target = $region190
      $region187: #{tpu_custom_call.1} parent=182 // loop_body
        %v241 = vld [vmem:[%s239] sm:%s232]
        %242 = vst [vmem:[%s240] sm:%s232] %v241
      $region188: #{tpu_custom_call.1} parent=182 // loop_footer
        %s238 = sadd.s32 1, %s234
      $region189: #{tpu_custom_call.1} parent=182 // loop_footer_branch
        %233 = sbr.rel target = $region185
      $region190: #{tpu_custom_call.1} parent=182 // loop_exit
        _
    $region183: #{tpu_custom_call.1} parent=1 // pred_fallthru
      _
    // Predicated region
    $region202: #{tpu_custom_call.1} parent=1 // pred_check
      _
    $region203: #{tpu_custom_call.1} parent=1 // pred_check_branch
      %259 = sbr.rel (0) target = $region205
    $region204: #{tpu_custom_call.1} parent=1 // pred_region
      %260 = vsyncadd %s226, 16
    $region205: #{tpu_custom_call.1} parent=1 // pred_fallthru
      _
    %s261 = sld [smem:[#allocation4 + $0x6]]
    %s262 = scalar_lea.vmem %s5, %s261
    %s263 = scalar_lea.vmem [#allocation2], 6
    %s264 = scalar_lea.sflag [#allocation3], 6
    // Predicated region
    $region206: #{tpu_custom_call.1} parent=1 // pred_check
      _
    $region207: #{tpu_custom_call.1} parent=1 // pred_check_branch
      %266 = sbr.rel target = $region209
    $region208: #{tpu_custom_call.1} parent=1 // pred_region
      // Predicated region
      $region221: #{tpu_custom_call.1} parent=208 // pred_check
        _
      $region222: #{tpu_custom_call.1} parent=208 // pred_check_branch
        %282 = sbr.rel (0) target = $region224
      $region223: #{tpu_custom_call.1} parent=208 // pred_region
        %s284 = ssub.s32 2, 1
        loop: start=0, step=1, limit=1
        $region225: #{tpu_custom_call.1} parent=223 // loop_pre_header
          _
        $region226: #{tpu_custom_call.1} parent=223 // loop_header
          %s286 = sphi 0, %s290
          %p287 = scmp.ge.s32.totalorder %s286, 1
          %s291 = sphi %s262, %s262
          %s292 = sphi %s263, %s263
        $region227: #{tpu_custom_call.1} parent=223 // loop_header_branch
          %289 = sbr.rel (%p287) target = $region231
        $region228: #{tpu_custom_call.1} parent=223 // loop_body
          %v293 = vld [vmem:[%s291] sm:%s284]
          %294 = vst [vmem:[%s292] sm:%s284] %v293
        $region229: #{tpu_custom_call.1} parent=223 // loop_footer
          %s290 = sadd.s32 1, %s286
        $region230: #{tpu_custom_call.1} parent=223 // loop_footer_branch
          %285 = sbr.rel target = $region226
        $region231: #{tpu_custom_call.1} parent=223 // loop_exit
          _
      $region224: #{tpu_custom_call.1} parent=208 // pred_fallthru
        _
    $region209: #{tpu_custom_call.1} parent=1 // pred_fallthru
      _
    // Predicated region
    $region210: #{tpu_custom_call.1} parent=1 // pred_check
      _
    $region211: #{tpu_custom_call.1} parent=1 // pred_check_branch
      %268 = sbr.rel (0) target = $region213
    $region212: #{tpu_custom_call.1} parent=1 // pred_region
      %s270 = ssub.s32 2, 1
      loop: start=0, step=1, limit=1
      $region214: #{tpu_custom_call.1} parent=212 // loop_pre_header
        _
      $region215: #{tpu_custom_call.1} parent=212 // loop_header
        %s272 = sphi 0, %s276
        %p273 = scmp.ge.s32.totalorder %s272, 1
        %s277 = sphi %s262, %s262
        %s278 = sphi %s263, %s263
      $region216: #{tpu_custom_call.1} parent=212 // loop_header_branch
        %275 = sbr.rel (%p273) target = $region220
      $region217: #{tpu_custom_call.1} parent=212 // loop_body
        %v279 = vld [vmem:[%s277] sm:%s270]
        %280 = vst [vmem:[%s278] sm:%s270] %v279
      $region218: #{tpu_custom_call.1} parent=212 // loop_footer
        %s276 = sadd.s32 1, %s272
      $region219: #{tpu_custom_call.1} parent=212 // loop_footer_branch
        %271 = sbr.rel target = $region215
      $region220: #{tpu_custom_call.1} parent=212 // loop_exit
        _
    $region213: #{tpu_custom_call.1} parent=1 // pred_fallthru
      _
    // Predicated region
    $region232: #{tpu_custom_call.1} parent=1 // pred_check
      _
    $region233: #{tpu_custom_call.1} parent=1 // pred_check_branch
      %297 = sbr.rel (0) target = $region235
    $region234: #{tpu_custom_call.1} parent=1 // pred_region
      %298 = vsyncadd %s264, 16
    $region235: #{tpu_custom_call.1} parent=1 // pred_fallthru
      _
    %s299 = sld [smem:[#allocation4 + $0x7]]
    %s300 = scalar_lea.vmem %s5, %s299
    %s301 = scalar_lea.vmem [#allocation2], 7
    %s302 = scalar_lea.sflag [#allocation3], 7
    // Predicated region
    $region236: #{tpu_custom_call.1} parent=1 // pred_check
      _
    $region237: #{tpu_custom_call.1} parent=1 // pred_check_branch
      %304 = sbr.rel target = $region239
    $region238: #{tpu_custom_call.1} parent=1 // pred_region
      // Predicated region
      $region251: #{tpu_custom_call.1} parent=238 // pred_check
        _
      $region252: #{tpu_custom_call.1} parent=238 // pred_check_branch
        %320 = sbr.rel (0) target = $region254
      $region253: #{tpu_custom_call.1} parent=238 // pred_region
        %s322 = ssub.s32 2, 1
        loop: start=0, step=1, limit=1
        $region255: #{tpu_custom_call.1} parent=253 // loop_pre_header
          _
        $region256: #{tpu_custom_call.1} parent=253 // loop_header
          %s324 = sphi 0, %s328
          %p325 = scmp.ge.s32.totalorder %s324, 1
          %s329 = sphi %s300, %s300
          %s330 = sphi %s301, %s301
        $region257: #{tpu_custom_call.1} parent=253 // loop_header_branch
          %327 = sbr.rel (%p325) target = $region261
        $region258: #{tpu_custom_call.1} parent=253 // loop_body
          %v331 = vld [vmem:[%s329] sm:%s322]
          %332 = vst [vmem:[%s330] sm:%s322] %v331
        $region259: #{tpu_custom_call.1} parent=253 // loop_footer
          %s328 = sadd.s32 1, %s324
        $region260: #{tpu_custom_call.1} parent=253 // loop_footer_branch
          %323 = sbr.rel target = $region256
        $region261: #{tpu_custom_call.1} parent=253 // loop_exit
          _
      $region254: #{tpu_custom_call.1} parent=238 // pred_fallthru
        _
    $region239: #{tpu_custom_call.1} parent=1 // pred_fallthru
      _
    // Predicated region
    $region240: #{tpu_custom_call.1} parent=1 // pred_check
      _
    $region241: #{tpu_custom_call.1} parent=1 // pred_check_branch
      %306 = sbr.rel (0) target = $region243
    $region242: #{tpu_custom_call.1} parent=1 // pred_region
      %s308 = ssub.s32 2, 1
      loop: start=0, step=1, limit=1
      $region244: #{tpu_custom_call.1} parent=242 // loop_pre_header
        _
      $region245: #{tpu_custom_call.1} parent=242 // loop_header
        %s310 = sphi 0, %s314
        %p311 = scmp.ge.s32.totalorder %s310, 1
        %s315 = sphi %s300, %s300
        %s316 = sphi %s301, %s301
      $region246: #{tpu_custom_call.1} parent=242 // loop_header_branch
        %313 = sbr.rel (%p311) target = $region250
      $region247: #{tpu_custom_call.1} parent=242 // loop_body
        %v317 = vld [vmem:[%s315] sm:%s308]
        %318 = vst [vmem:[%s316] sm:%s308] %v317
      $region248: #{tpu_custom_call.1} parent=242 // loop_footer
        %s314 = sadd.s32 1, %s310
      $region249: #{tpu_custom_call.1} parent=242 // loop_footer_branch
        %309 = sbr.rel target = $region245
      $region250: #{tpu_custom_call.1} parent=242 // loop_exit
        _
    $region243: #{tpu_custom_call.1} parent=1 // pred_fallthru
      _
    // Predicated region
    $region262: #{tpu_custom_call.1} parent=1 // pred_check
      _
    $region263: #{tpu_custom_call.1} parent=1 // pred_check_branch
      %335 = sbr.rel (0) target = $region265
    $region264: #{tpu_custom_call.1} parent=1 // pred_region
      %336 = vsyncadd %s302, 16
    $region265: #{tpu_custom_call.1} parent=1 // pred_fallthru
      _
    %v337 = vld [vmem:[%s1] sm:$0xff]
    %v338 = vlaneseq
    %v339 = vand.u32 %v338, 127
    %340 = vset.pattern.permute.xlu0 0
    %341 = vperm.xlu0 %340, %v337
    %v342 = vpop.permute.xlu0 %341
    %vm343 = vcmp.eq.s32.totalorder %v339, %v342
    %v344 = vsel %vm343, 1, 0
    %v345 = vcvt.s32.f32 %v344
    %v346 = vadd.s32 %v339, 128
    %v347 = vadd.s32 %v339, 256
    %v348 = vadd.s32 %v339, 384
    %v349 = vadd.s32 %v339, 512
    %v350 = vadd.s32 %v339, 640
    %v351 = vadd.s32 %v339, 768
    %v352 = vadd.s32 %v339, 896
    %v353 = vadd.s32 %v339, 1024
    %v354 = vadd.s32 %v339, 1152
    %v355 = vadd.s32 %v339, 1280
    %v356 = vadd.s32 %v339, 1408
    %357 = vset.pattern.permute.xlu0 1
    %358 = vperm.xlu0 %357, %v337
    %v359 = vpop.permute.xlu0 %358
    %vm360 = vcmp.eq.s32.totalorder %v339, %v359
    %vm361 = vcmp.eq.s32.totalorder %v346, %v359
    %vm362 = vcmp.eq.s32.totalorder %v347, %v359
    %vm363 = vcmp.eq.s32.totalorder %v348, %v359
    %vm364 = vcmp.eq.s32.totalorder %v349, %v359
    %vm365 = vcmp.eq.s32.totalorder %v350, %v359
    %vm366 = vcmp.eq.s32.totalorder %v351, %v359
    %vm367 = vcmp.eq.s32.totalorder %v352, %v359
    %vm368 = vcmp.eq.s32.totalorder %v353, %v359
    %vm369 = vcmp.eq.s32.totalorder %v354, %v359
    %vm370 = vcmp.eq.s32.totalorder %v355, %v359
    %vm371 = vcmp.eq.s32.totalorder %v356, %v359
    %v372 = vsel %vm360, 1, 0
    %v373 = vsel %vm361, 1, 0
    %v374 = vsel %vm362, 1, 0
    %v375 = vsel %vm363, 1, 0
    %v376 = vsel %vm364, 1, 0
    %v377 = vsel %vm365, 1, 0
    %v378 = vsel %vm366, 1, 0
    %v379 = vsel %vm367, 1, 0
    %v380 = vsel %vm368, 1, 0
    %v381 = vsel %vm369, 1, 0
    %v382 = vsel %vm370, 1, 0
    %v383 = vsel %vm371, 1, 0
    %v384 = vcvt.s32.f32 %v372
    %v385 = vcvt.s32.f32 %v373
    %v386 = vcvt.s32.f32 %v374
    %v387 = vcvt.s32.f32 %v375
    %v388 = vcvt.s32.f32 %v376
    %v389 = vcvt.s32.f32 %v377
    %v390 = vcvt.s32.f32 %v378
    %v391 = vcvt.s32.f32 %v379
    %v392 = vcvt.s32.f32 %v380
    %v393 = vcvt.s32.f32 %v381
    %v394 = vcvt.s32.f32 %v382
    %v395 = vcvt.s32.f32 %v383
    %v396 = vld [vmem:[%s3] sm:$0xff]
    %vm397 = vcmask 64512
    %v399 = vsel %vm397, %v345, 0
    %401 = vmatpush.msra.mxu0 0.0
    %402 = vmatpush.msra.mxu0 0.0
    %403 = vmatpush.msra.mxu0 0.0
    %404 = vmatpush.msra.mxu0 0.0
    %405 = vmatpush.msra.mxu0 0.0
    %406 = vmatpush.msra.mxu0 0.0
    %407 = vmatpush.msra.mxu0 0.0
    %408 = vmatpush.msra.mxu0 0.0
    %409 = vmatpush.msra.mxu0 0.0
    %410 = vmatpush.msra.mxu0 0.0
    %411 = vmatpush.msra.mxu0 0.0
    %412 = vmatpush.msra.mxu0 0.0
    %413 = vmatpush.msra.mxu0 0.0
    %414 = vmatpush.msra.mxu0 0.0
    %415 = vmatpush.msra.mxu0 0.0
    %416 = vmatpush.msra.mxu0 %v396
    %417 = vmatmul.f32.gmra.mxu0 %v399
    %v418 = vpop.f32.mrf.mxu0
    %v419 = vadd.f32 0.0, %v418
    %420 = vdwg.mxu0
    %v421 = vld [vmem:[%s4] sm:$0xff]
    %v422 = vld [vmem:[%s4 + $0x8] sm:$0xff]
    %v423 = vld [vmem:[%s4 + $0x10] sm:$0xff]
    %v424 = vld [vmem:[%s4 + $0x18] sm:$0xff]
    %v425 = vld [vmem:[%s4 + $0x20] sm:$0xff]
    %v426 = vld [vmem:[%s4 + $0x28] sm:$0xff]
    %v427 = vld [vmem:[%s4 + $0x30] sm:$0xff]
    %v428 = vld [vmem:[%s4 + $0x38] sm:$0xff]
    %v429 = vld [vmem:[%s4 + $0x40] sm:$0xff]
    %v430 = vld [vmem:[%s4 + $0x48] sm:$0xff]
    %v431 = vld [vmem:[%s4 + $0x50] sm:$0xff]
    %v432 = vld [vmem:[%s4 + $0x58] sm:$0xff]
    %v433 = vld [vmem:[%s4 + $0x60] sm:$0xff]
    %v434 = vld [vmem:[%s4 + $0x68] sm:$0xff]
    %v435 = vld [vmem:[%s4 + $0x70] sm:$0xff]
    %v436 = vld [vmem:[%s4 + $0x78] sm:$0xff]
    %v437 = vld [vmem:[%s4 + $0x80] sm:$0xff]
    %v438 = vld [vmem:[%s4 + $0x88] sm:$0xff]
    %v439 = vld [vmem:[%s4 + $0x90] sm:$0xff]
    %v440 = vld [vmem:[%s4 + $0x98] sm:$0xff]
    %v441 = vld [vmem:[%s4 + $0xa0] sm:$0xff]
    %v442 = vld [vmem:[%s4 + $0xa8] sm:$0xff]
    %v443 = vld [vmem:[%s4 + $0xb0] sm:$0xff]
    %v444 = vld [vmem:[%s4 + $0xb8] sm:$0xff]
    %v445 = vld [vmem:[%s4 + $0xc0] sm:$0xff]
    %v446 = vld [vmem:[%s4 + $0xc8] sm:$0xff]
    %v447 = vld [vmem:[%s4 + $0xd0] sm:$0xff]
    %v448 = vld [vmem:[%s4 + $0xd8] sm:$0xff]
    %v449 = vld [vmem:[%s4 + $0xe0] sm:$0xff]
    %v450 = vld [vmem:[%s4 + $0xe8] sm:$0xff]
    %v451 = vld [vmem:[%s4 + $0xf0] sm:$0xff]
    %v452 = vld [vmem:[%s4 + $0xf8] sm:$0xff]
    %v453 = vld [vmem:[%s4 + $0x100] sm:$0xff]
    %v454 = vld [vmem:[%s4 + $0x108] sm:$0xff]
    %v455 = vld [vmem:[%s4 + $0x110] sm:$0xff]
    %v456 = vld [vmem:[%s4 + $0x118] sm:$0xff]
    %v457 = vld [vmem:[%s4 + $0x120] sm:$0xff]
    %v458 = vld [vmem:[%s4 + $0x128] sm:$0xff]
    %v459 = vld [vmem:[%s4 + $0x130] sm:$0xff]
    %v460 = vld [vmem:[%s4 + $0x138] sm:$0xff]
    %v461 = vld [vmem:[%s4 + $0x140] sm:$0xff]
    %v462 = vld [vmem:[%s4 + $0x148] sm:$0xff]
    %v463 = vld [vmem:[%s4 + $0x150] sm:$0xff]
    %v464 = vld [vmem:[%s4 + $0x158] sm:$0xff]
    %v465 = vld [vmem:[%s4 + $0x160] sm:$0xff]
    %v466 = vld [vmem:[%s4 + $0x168] sm:$0xff]
    %v467 = vld [vmem:[%s4 + $0x170] sm:$0xff]
    %v468 = vld [vmem:[%s4 + $0x178] sm:$0xff]
    %v469 = vld [vmem:[%s4 + $0x180] sm:$0xff]
    %v470 = vld [vmem:[%s4 + $0x188] sm:$0xff]
    %v471 = vld [vmem:[%s4 + $0x190] sm:$0xff]
    %v472 = vld [vmem:[%s4 + $0x198] sm:$0xff]
    %v473 = vld [vmem:[%s4 + $0x1a0] sm:$0xff]
    %v474 = vld [vmem:[%s4 + $0x1a8] sm:$0xff]
    %v475 = vld [vmem:[%s4 + $0x1b0] sm:$0xff]
    %v476 = vld [vmem:[%s4 + $0x1b8] sm:$0xff]
    %v477 = vld [vmem:[%s4 + $0x1c0] sm:$0xff]
    %v478 = vld [vmem:[%s4 + $0x1c8] sm:$0xff]
    %v479 = vld [vmem:[%s4 + $0x1d0] sm:$0xff]
    %v480 = vld [vmem:[%s4 + $0x1d8] sm:$0xff]
    %v481 = vld [vmem:[%s4 + $0x1e0] sm:$0xff]
    %v482 = vld [vmem:[%s4 + $0x1e8] sm:$0xff]
    %v483 = vld [vmem:[%s4 + $0x1f0] sm:$0xff]
    %v484 = vld [vmem:[%s4 + $0x1f8] sm:$0xff]
    %v485 = vld [vmem:[%s4 + $0x200] sm:$0xff]
    %v486 = vld [vmem:[%s4 + $0x208] sm:$0xff]
    %v487 = vld [vmem:[%s4 + $0x210] sm:$0xff]
    %v488 = vld [vmem:[%s4 + $0x218] sm:$0xff]
    %v489 = vld [vmem:[%s4 + $0x220] sm:$0xff]
    %v490 = vld [vmem:[%s4 + $0x228] sm:$0xff]
    %v491 = vld [vmem:[%s4 + $0x230] sm:$0xff]
    %v492 = vld [vmem:[%s4 + $0x238] sm:$0xff]
    %v493 = vld [vmem:[%s4 + $0x240] sm:$0xff]
    %v494 = vld [vmem:[%s4 + $0x248] sm:$0xff]
    %v495 = vld [vmem:[%s4 + $0x250] sm:$0xff]
    %v496 = vld [vmem:[%s4 + $0x258] sm:$0xff]
    %v497 = vld [vmem:[%s4 + $0x260] sm:$0xff]
    %v498 = vld [vmem:[%s4 + $0x268] sm:$0xff]
    %v499 = vld [vmem:[%s4 + $0x270] sm:$0xff]
    %v500 = vld [vmem:[%s4 + $0x278] sm:$0xff]
    %v501 = vld [vmem:[%s4 + $0x280] sm:$0xff]
    %v502 = vld [vmem:[%s4 + $0x288] sm:$0xff]
    %v503 = vld [vmem:[%s4 + $0x290] sm:$0xff]
    %v504 = vld [vmem:[%s4 + $0x298] sm:$0xff]
    %v505 = vld [vmem:[%s4 + $0x2a0] sm:$0xff]
    %v506 = vld [vmem:[%s4 + $0x2a8] sm:$0xff]
    %v507 = vld [vmem:[%s4 + $0x2b0] sm:$0xff]
    %v508 = vld [vmem:[%s4 + $0x2b8] sm:$0xff]
    %v509 = vld [vmem:[%s4 + $0x2c0] sm:$0xff]
    %v510 = vld [vmem:[%s4 + $0x2c8] sm:$0xff]
    %v511 = vld [vmem:[%s4 + $0x2d0] sm:$0xff]
    %v512 = vld [vmem:[%s4 + $0x2d8] sm:$0xff]
    %v513 = vld [vmem:[%s4 + $0x2e0] sm:$0xff]
    %v514 = vld [vmem:[%s4 + $0x2e8] sm:$0xff]
    %v515 = vld [vmem:[%s4 + $0x2f0] sm:$0xff]
    %v516 = vld [vmem:[%s4 + $0x2f8] sm:$0xff]
    %v517 = vld [vmem:[%s4 + $0x300] sm:$0xff]
    %v518 = vld [vmem:[%s4 + $0x308] sm:$0xff]
    %v519 = vld [vmem:[%s4 + $0x310] sm:$0xff]
    %v520 = vld [vmem:[%s4 + $0x318] sm:$0xff]
    %v521 = vld [vmem:[%s4 + $0x320] sm:$0xff]
    %v522 = vld [vmem:[%s4 + $0x328] sm:$0xff]
    %v523 = vld [vmem:[%s4 + $0x330] sm:$0xff]
    %v524 = vld [vmem:[%s4 + $0x338] sm:$0xff]
    %v525 = vld [vmem:[%s4 + $0x340] sm:$0xff]
    %v526 = vld [vmem:[%s4 + $0x348] sm:$0xff]
    %v527 = vld [vmem:[%s4 + $0x350] sm:$0xff]
    %v528 = vld [vmem:[%s4 + $0x358] sm:$0xff]
    %v529 = vld [vmem:[%s4 + $0x360] sm:$0xff]
    %v530 = vld [vmem:[%s4 + $0x368] sm:$0xff]
    %v531 = vld [vmem:[%s4 + $0x370] sm:$0xff]
    %v532 = vld [vmem:[%s4 + $0x378] sm:$0xff]
    %v533 = vld [vmem:[%s4 + $0x380] sm:$0xff]
    %v534 = vld [vmem:[%s4 + $0x388] sm:$0xff]
    %v535 = vld [vmem:[%s4 + $0x390] sm:$0xff]
    %v536 = vld [vmem:[%s4 + $0x398] sm:$0xff]
    %v537 = vld [vmem:[%s4 + $0x3a0] sm:$0xff]
    %v538 = vld [vmem:[%s4 + $0x3a8] sm:$0xff]
    %v539 = vld [vmem:[%s4 + $0x3b0] sm:$0xff]
    %v540 = vld [vmem:[%s4 + $0x3b8] sm:$0xff]
    %v541 = vld [vmem:[%s4 + $0x3c0] sm:$0xff]
    %v542 = vld [vmem:[%s4 + $0x3c8] sm:$0xff]
    %v543 = vld [vmem:[%s4 + $0x3d0] sm:$0xff]
    %v544 = vld [vmem:[%s4 + $0x3d8] sm:$0xff]
    %v545 = vld [vmem:[%s4 + $0x3e0] sm:$0xff]
    %v546 = vld [vmem:[%s4 + $0x3e8] sm:$0xff]
    %v547 = vld [vmem:[%s4 + $0x3f0] sm:$0xff]
    %v548 = vld [vmem:[%s4 + $0x3f8] sm:$0xff]
    %v549 = vld [vmem:[%s4 + $0x400] sm:$0xff]
    %v550 = vld [vmem:[%s4 + $0x408] sm:$0xff]
    %v551 = vld [vmem:[%s4 + $0x410] sm:$0xff]
    %v552 = vld [vmem:[%s4 + $0x418] sm:$0xff]
    %v553 = vld [vmem:[%s4 + $0x420] sm:$0xff]
    %v554 = vld [vmem:[%s4 + $0x428] sm:$0xff]
    %v555 = vld [vmem:[%s4 + $0x430] sm:$0xff]
    %v556 = vld [vmem:[%s4 + $0x438] sm:$0xff]
    %v557 = vld [vmem:[%s4 + $0x440] sm:$0xff]
    %v558 = vld [vmem:[%s4 + $0x448] sm:$0xff]
    %v559 = vld [vmem:[%s4 + $0x450] sm:$0xff]
    %v560 = vld [vmem:[%s4 + $0x458] sm:$0xff]
    %v561 = vld [vmem:[%s4 + $0x460] sm:$0xff]
    %v562 = vld [vmem:[%s4 + $0x468] sm:$0xff]
    %v563 = vld [vmem:[%s4 + $0x470] sm:$0xff]
    %v564 = vld [vmem:[%s4 + $0x478] sm:$0xff]
    %v565 = vld [vmem:[%s4 + $0x480] sm:$0xff]
    %v566 = vld [vmem:[%s4 + $0x488] sm:$0xff]
    %v567 = vld [vmem:[%s4 + $0x490] sm:$0xff]
    %v568 = vld [vmem:[%s4 + $0x498] sm:$0xff]
    %v569 = vld [vmem:[%s4 + $0x4a0] sm:$0xff]
    %v570 = vld [vmem:[%s4 + $0x4a8] sm:$0xff]
    %v571 = vld [vmem:[%s4 + $0x4b0] sm:$0xff]
    %v572 = vld [vmem:[%s4 + $0x4b8] sm:$0xff]
    %v573 = vld [vmem:[%s4 + $0x4c0] sm:$0xff]
    %v574 = vld [vmem:[%s4 + $0x4c8] sm:$0xff]
    %v575 = vld [vmem:[%s4 + $0x4d0] sm:$0xff]
    %v576 = vld [vmem:[%s4 + $0x4d8] sm:$0xff]
    %v577 = vld [vmem:[%s4 + $0x4e0] sm:$0xff]
    %v578 = vld [vmem:[%s4 + $0x4e8] sm:$0xff]
    %v579 = vld [vmem:[%s4 + $0x4f0] sm:$0xff]
    %v580 = vld [vmem:[%s4 + $0x4f8] sm:$0xff]
    %v581 = vld [vmem:[%s4 + $0x500] sm:$0xff]
    %v582 = vld [vmem:[%s4 + $0x508] sm:$0xff]
    %v583 = vld [vmem:[%s4 + $0x510] sm:$0xff]
    %v584 = vld [vmem:[%s4 + $0x518] sm:$0xff]
    %v585 = vld [vmem:[%s4 + $0x520] sm:$0xff]
    %v586 = vld [vmem:[%s4 + $0x528] sm:$0xff]
    %v587 = vld [vmem:[%s4 + $0x530] sm:$0xff]
    %v588 = vld [vmem:[%s4 + $0x538] sm:$0xff]
    %v589 = vld [vmem:[%s4 + $0x540] sm:$0xff]
    %v590 = vld [vmem:[%s4 + $0x548] sm:$0xff]
    %v591 = vld [vmem:[%s4 + $0x550] sm:$0xff]
    %v592 = vld [vmem:[%s4 + $0x558] sm:$0xff]
    %v593 = vld [vmem:[%s4 + $0x560] sm:$0xff]
    %v594 = vld [vmem:[%s4 + $0x568] sm:$0xff]
    %v595 = vld [vmem:[%s4 + $0x570] sm:$0xff]
    %v596 = vld [vmem:[%s4 + $0x578] sm:$0xff]
    %v597 = vld [vmem:[%s4 + $0x580] sm:$0xff]
    %v598 = vld [vmem:[%s4 + $0x588] sm:$0xff]
    %v599 = vld [vmem:[%s4 + $0x590] sm:$0xff]
    %v600 = vld [vmem:[%s4 + $0x598] sm:$0xff]
    %vm601 = vcmask 261120
    %v603 = vsel %vm601, %v395, 0
    %605 = vmatpush.msra.mxu0 %v436
    %606 = vmatpush.msra.mxu0 %v435
    %607 = vmatpush.msra.mxu0 %v434
    %608 = vmatpush.msra.mxu0 %v433
    %609 = vmatpush.msra.mxu0 %v432
    %610 = vmatpush.msra.mxu0 %v431
    %611 = vmatpush.msra.mxu0 %v430
    %612 = vmatpush.msra.mxu0 %v429
    %613 = vmatpush.msra.mxu0 %v428
    %614 = vmatpush.msra.mxu0 %v427
    %615 = vmatpush.msra.mxu0 %v426
    %616 = vmatpush.msra.mxu0 %v425
    %617 = vmatpush.msra.mxu0 %v424
    %618 = vmatpush.msra.mxu0 %v423
    %619 = vmatpush.msra.mxu0 %v422
    %620 = vmatpush.msra.mxu0 %v421
    %621 = vmatmul.f32.gmra.mxu0 %v384
    %v622 = vpop.f32.mrf.mxu0
    %v623 = vadd.f32 0.0, %v622
    %624 = vdwg.mxu0
    %625 = vmatpush.msra.mxu0 %v452
    %626 = vmatpush.msra.mxu0 %v451
    %627 = vmatpush.msra.mxu0 %v450
    %628 = vmatpush.msra.mxu0 %v449
    %629 = vmatpush.msra.mxu0 %v448
    %630 = vmatpush.msra.mxu0 %v447
    %631 = vmatpush.msra.mxu0 %v446
    %632 = vmatpush.msra.mxu0 %v445
    %633 = vmatpush.msra.mxu0 %v444
    %634 = vmatpush.msra.mxu0 %v443
    %635 = vmatpush.msra.mxu0 %v442
    %636 = vmatpush.msra.mxu0 %v441
    %637 = vmatpush.msra.mxu0 %v440
    %638 = vmatpush.msra.mxu0 %v439
    %639 = vmatpush.msra.mxu0 %v438
    %640 = vmatpush.msra.mxu0 %v437
    %641 = vmatmul.f32.gmra.mxu0 %v385
    %v642 = vpop.f32.mrf.mxu0
    %v643 = vadd.f32 %v623, %v642
    %644 = vdwg.mxu0
    %645 = vmatpush.msra.mxu0 %v468
    %646 = vmatpush.msra.mxu0 %v467
    %647 = vmatpush.msra.mxu0 %v466
    %648 = vmatpush.msra.mxu0 %v465
    %649 = vmatpush.msra.mxu0 %v464
    %650 = vmatpush.msra.mxu0 %v463
    %651 = vmatpush.msra.mxu0 %v462
    %652 = vmatpush.msra.mxu0 %v461
    %653 = vmatpush.msra.mxu0 %v460
    %654 = vmatpush.msra.mxu0 %v459
    %655 = vmatpush.msra.mxu0 %v458
    %656 = vmatpush.msra.mxu0 %v457
    %657 = vmatpush.msra.mxu0 %v456
    %658 = vmatpush.msra.mxu0 %v455
    %659 = vmatpush.msra.mxu0 %v454
    %660 = vmatpush.msra.mxu0 %v453
    %661 = vmatmul.f32.gmra.mxu0 %v386
    %v662 = vpop.f32.mrf.mxu0
    %v663 = vadd.f32 %v643, %v662
    %664 = vdwg.mxu0
    %665 = vmatpush.msra.mxu0 %v484
    %666 = vmatpush.msra.mxu0 %v483
    %667 = vmatpush.msra.mxu0 %v482
    %668 = vmatpush.msra.mxu0 %v481
    %669 = vmatpush.msra.mxu0 %v480
    %670 = vmatpush.msra.mxu0 %v479
    %671 = vmatpush.msra.mxu0 %v478
    %672 = vmatpush.msra.mxu0 %v477
    %673 = vmatpush.msra.mxu0 %v476
    %674 = vmatpush.msra.mxu0 %v475
    %675 = vmatpush.msra.mxu0 %v474
    %676 = vmatpush.msra.mxu0 %v473
    %677 = vmatpush.msra.mxu0 %v472
    %678 = vmatpush.msra.mxu0 %v471
    %679 = vmatpush.msra.mxu0 %v470
    %680 = vmatpush.msra.mxu0 %v469
    %681 = vmatmul.f32.gmra.mxu0 %v387
    %v682 = vpop.f32.mrf.mxu0
    %v683 = vadd.f32 %v663, %v682
    %684 = vdwg.mxu0
    %685 = vmatpush.msra.mxu0 %v500
    %686 = vmatpush.msra.mxu0 %v499
    %687 = vmatpush.msra.mxu0 %v498
    %688 = vmatpush.msra.mxu0 %v497
    %689 = vmatpush.msra.mxu0 %v496
    %690 = vmatpush.msra.mxu0 %v495
    %691 = vmatpush.msra.mxu0 %v494
    %692 = vmatpush.msra.mxu0 %v493
    %693 = vmatpush.msra.mxu0 %v492
    %694 = vmatpush.msra.mxu0 %v491
    %695 = vmatpush.msra.mxu0 %v490
    %696 = vmatpush.msra.mxu0 %v489
    %697 = vmatpush.msra.mxu0 %v488
    %698 = vmatpush.msra.mxu0 %v487
    %699 = vmatpush.msra.mxu0 %v486
    %700 = vmatpush.msra.mxu0 %v485
    %701 = vmatmul.f32.gmra.mxu0 %v388
    %v702 = vpop.f32.mrf.mxu0
    %v703 = vadd.f32 %v683, %v702
    %704 = vdwg.mxu0
    %705 = vmatpush.msra.mxu0 %v516
    %706 = vmatpush.msra.mxu0 %v515
    %707 = vmatpush.msra.mxu0 %v514
    %708 = vmatpush.msra.mxu0 %v513
    %709 = vmatpush.msra.mxu0 %v512
    %710 = vmatpush.msra.mxu0 %v511
    %711 = vmatpush.msra.mxu0 %v510
    %712 = vmatpush.msra.mxu0 %v509
    %713 = vmatpush.msra.mxu0 %v508
    %714 = vmatpush.msra.mxu0 %v507
    %715 = vmatpush.msra.mxu0 %v506
    %716 = vmatpush.msra.mxu0 %v505
    %717 = vmatpush.msra.mxu0 %v504
    %718 = vmatpush.msra.mxu0 %v503
    %719 = vmatpush.msra.mxu0 %v502
    %720 = vmatpush.msra.mxu0 %v501
    %721 = vmatmul.f32.gmra.mxu0 %v389
    %v722 = vpop.f32.mrf.mxu0
    %v723 = vadd.f32 %v703, %v722
    %724 = vdwg.mxu0
    %725 = vmatpush.msra.mxu0 %v532
    %726 = vmatpush.msra.mxu0 %v531
    %727 = vmatpush.msra.mxu0 %v530
    %728 = vmatpush.msra.mxu0 %v529
    %729 = vmatpush.msra.mxu0 %v528
    %730 = vmatpush.msra.mxu0 %v527
    %731 = vmatpush.msra.mxu0 %v526
    %732 = vmatpush.msra.mxu0 %v525
    %733 = vmatpush.msra.mxu0 %v524
    %734 = vmatpush.msra.mxu0 %v523
    %735 = vmatpush.msra.mxu0 %v522
    %736 = vmatpush.msra.mxu0 %v521
    %737 = vmatpush.msra.mxu0 %v520
    %738 = vmatpush.msra.mxu0 %v519
    %739 = vmatpush.msra.mxu0 %v518
    %740 = vmatpush.msra.mxu0 %v517
    %741 = vmatmul.f32.gmra.mxu0 %v390
    %v742 = vpop.f32.mrf.mxu0
    %v743 = vadd.f32 %v723, %v742
    %744 = vdwg.mxu0
    %745 = vmatpush.msra.mxu0 %v548
    %746 = vmatpush.msra.mxu0 %v547
    %747 = vmatpush.msra.mxu0 %v546
    %748 = vmatpush.msra.mxu0 %v545
    %749 = vmatpush.msra.mxu0 %v544
    %750 = vmatpush.msra.mxu0 %v543
    %751 = vmatpush.msra.mxu0 %v542
    %752 = vmatpush.msra.mxu0 %v541
    %753 = vmatpush.msra.mxu0 %v540
    %754 = vmatpush.msra.mxu0 %v539
    %755 = vmatpush.msra.mxu0 %v538
    %756 = vmatpush.msra.mxu0 %v537
    %757 = vmatpush.msra.mxu0 %v536
    %758 = vmatpush.msra.mxu0 %v535
    %759 = vmatpush.msra.mxu0 %v534
    %760 = vmatpush.msra.mxu0 %v533
    %761 = vmatmul.f32.gmra.mxu0 %v391
    %v762 = vpop.f32.mrf.mxu0
    %v763 = vadd.f32 %v743, %v762
    %764 = vdwg.mxu0
    %765 = vmatpush.msra.mxu0 %v564
    %766 = vmatpush.msra.mxu0 %v563
    %767 = vmatpush.msra.mxu0 %v562
    %768 = vmatpush.msra.mxu0 %v561
    %769 = vmatpush.msra.mxu0 %v560
    %770 = vmatpush.msra.mxu0 %v559
    %771 = vmatpush.msra.mxu0 %v558
    %772 = vmatpush.msra.mxu0 %v557
    %773 = vmatpush.msra.mxu0 %v556
    %774 = vmatpush.msra.mxu0 %v555
    %775 = vmatpush.msra.mxu0 %v554
    %776 = vmatpush.msra.mxu0 %v553
    %777 = vmatpush.msra.mxu0 %v552
    %778 = vmatpush.msra.mxu0 %v551
    %779 = vmatpush.msra.mxu0 %v550
    %780 = vmatpush.msra.mxu0 %v549
    %781 = vmatmul.f32.gmra.mxu0 %v392
    %v782 = vpop.f32.mrf.mxu0
    %v783 = vadd.f32 %v763, %v782
    %784 = vdwg.mxu0
    %785 = vmatpush.msra.mxu0 %v580
    %786 = vmatpush.msra.mxu0 %v579
    %787 = vmatpush.msra.mxu0 %v578
    %788 = vmatpush.msra.mxu0 %v577
    %789 = vmatpush.msra.mxu0 %v576
    %790 = vmatpush.msra.mxu0 %v575
    %791 = vmatpush.msra.mxu0 %v574
    %792 = vmatpush.msra.mxu0 %v573
    %793 = vmatpush.msra.mxu0 %v572
    %794 = vmatpush.msra.mxu0 %v571
    %795 = vmatpush.msra.mxu0 %v570
    %796 = vmatpush.msra.mxu0 %v569
    %797 = vmatpush.msra.mxu0 %v568
    %798 = vmatpush.msra.mxu0 %v567
    %799 = vmatpush.msra.mxu0 %v566
    %800 = vmatpush.msra.mxu0 %v565
    %801 = vmatmul.f32.gmra.mxu0 %v393
    %v802 = vpop.f32.mrf.mxu0
    %v803 = vadd.f32 %v783, %v802
    %804 = vdwg.mxu0
    %805 = vmatpush.msra.mxu0 %v596
    %806 = vmatpush.msra.mxu0 %v595
    %807 = vmatpush.msra.mxu0 %v594
    %808 = vmatpush.msra.mxu0 %v593
    %809 = vmatpush.msra.mxu0 %v592
    %810 = vmatpush.msra.mxu0 %v591
    %811 = vmatpush.msra.mxu0 %v590
    %812 = vmatpush.msra.mxu0 %v589
    %813 = vmatpush.msra.mxu0 %v588
    %814 = vmatpush.msra.mxu0 %v587
    %815 = vmatpush.msra.mxu0 %v586
    %816 = vmatpush.msra.mxu0 %v585
    %817 = vmatpush.msra.mxu0 %v584
    %818 = vmatpush.msra.mxu0 %v583
    %819 = vmatpush.msra.mxu0 %v582
    %820 = vmatpush.msra.mxu0 %v581
    %821 = vmatmul.f32.gmra.mxu0 %v394
    %v822 = vpop.f32.mrf.mxu0
    %v823 = vadd.f32 %v803, %v822
    %824 = vdwg.mxu0
    %825 = vmatpush.msra.mxu0 0.0
    %826 = vmatpush.msra.mxu0 0.0
    %827 = vmatpush.msra.mxu0 0.0
    %828 = vmatpush.msra.mxu0 0.0
    %829 = vmatpush.msra.mxu0 0.0
    %830 = vmatpush.msra.mxu0 0.0
    %831 = vmatpush.msra.mxu0 0.0
    %832 = vmatpush.msra.mxu0 0.0
    %833 = vmatpush.msra.mxu0 0.0
    %834 = vmatpush.msra.mxu0 0.0
    %835 = vmatpush.msra.mxu0 0.0
    %836 = vmatpush.msra.mxu0 0.0
    %837 = vmatpush.msra.mxu0 %v600
    %838 = vmatpush.msra.mxu0 %v599
    %839 = vmatpush.msra.mxu0 %v598
    %840 = vmatpush.msra.mxu0 %v597
    %841 = vmatmul.f32.gmra.mxu0 %v603
    %v842 = vpop.f32.mrf.mxu0
    %v843 = vadd.f32 %v823, %v842
    %844 = vdwg.mxu0
    %v845 = vld [vmem:[%s2] sm:$0xff]
    %v846 = vsub.f32 %v845, 10.0
    %v847 = vrcp.pop 5.0
    %v848 = vmul.f32 5.0, %v847
    %v849 = vsub.f32 1.0, %v848
    %v850 = vmul.f32 %v847, %v849
    %v851 = vadd.f32 %v847, %v850
    %vm852 = vweird.f32 %v847
    %v853 = vsel %vm852, %v847, %v851
    %v854 = vmul.f32 %v846, %v853
    %856 = vrot.lane.b32.xlu0 %v419, 16
    %v857 = vpop.permute.xlu0 %856
    %vm859 = vcmask 154752
    %860 = vst.msk [vmem:[#allocation7] sm:$0xff] %vm859, %v857
    %862 = vrot.lane.b32.xlu0 %v843, 19
    %v863 = vpop.permute.xlu0 %862
    %vm865 = vcmask 220312
    %866 = vst.msk [vmem:[#allocation7] sm:$0xff] %vm865, %v863
    %868 = vrot.lane.b32.xlu0 %v854, 27
    %v869 = vpop.permute.xlu0 %868
    %vm871 = vcmask 228568
    %872 = vst.msk [vmem:[#allocation7] sm:$0xff] %vm871, %v869
    %s873 = smul.u32 1, 1
    %s874 = sshll.u32 %s873, 4
    %875 = dma.done [#allocation3], %s874
    %s876 = sshll.u32 %s873, 4
    %877 = dma.done %s74, %s876
    %s878 = sshll.u32 %s873, 4
    %879 = dma.done %s112, %s878
    %s880 = sshll.u32 %s873, 4
    %881 = dma.done %s150, %s880
    %s882 = sshll.u32 %s873, 4
    %883 = dma.done %s188, %s882
    %s884 = sshll.u32 %s873, 4
    %885 = dma.done %s226, %s884
    %s886 = sshll.u32 %s873, 4
    %887 = dma.done %s264, %s886
    %s888 = sshll.u32 %s873, 4
    %889 = dma.done %s302, %s888
    %v890 = vld [vmem:[#allocation2] sm:$0xff]
    %vm891 = vcmask 130048
    %892 = vst.msk [vmem:[#allocation7] sm:$0xff] %vm891, %v890
    // Predicated region
    $region266: #{tpu_custom_call.1} parent=1 // pred_check
      _
    $region267: #{tpu_custom_call.1} parent=1 // pred_check_branch
      %894 = sbr.rel (0) target = $region269
    $region268: #{tpu_custom_call.1} parent=1 // pred_region
      %896 = vsyncadd [#allocation5], 0
      %s898 = sshll.u32 [#allocation7], 4
      %s899 = int_to_ptr.vmem [resolvable:$true] %s898
      %s900 = sshll.u32 %s6, 4
      %s901 = int_to_ptr.hbm [resolvable:$true] %s900
      %903 = dma.vmem_to_hbm [thread:$0]  %s899, 128, %s901, [#allocation5]
    $region269: #{tpu_custom_call.1} parent=1 // pred_fallthru
      _
    // Predicated region
    $region270: #{tpu_custom_call.1} parent=1 // pred_check
      _
    $region271: #{tpu_custom_call.1} parent=1 // pred_check_branch
      %905 = sbr.rel (0) target = $region273
    $region272: #{tpu_custom_call.1} parent=1 // pred_region
      %907 = dma.done [#allocation5], 128
    $region273: #{tpu_custom_call.1} parent=1 // pred_fallthru
      _
    %908 = vsyncpa [#allocation5], 1
    %909 = vsyncpa [#allocation6], 1
  %910 = vsyncmov [#allocation3]
  %s911 = vpop.sfrf %910
  %p912 = scmp.eq.s32.totalorder %s911, 0
  %p913 = pneg %p912
  %915 = shalt.err (%p913)
  %s916 = scalar_lea.sflag [#allocation3], 1
  %917 = vsyncmov %s916
  %s918 = vpop.sfrf %917
  %p919 = scmp.eq.s32.totalorder %s918, 0
  %p920 = pneg %p919
  %922 = shalt.err (%p920)
  %s923 = scalar_lea.sflag [#allocation3], 2
  %924 = vsyncmov %s923
  %s925 = vpop.sfrf %924
  %p926 = scmp.eq.s32.totalorder %s925, 0
  %p927 = pneg %p926
  %929 = shalt.err (%p927)
  %s930 = scalar_lea.sflag [#allocation3], 3
  %931 = vsyncmov %s930
  %s932 = vpop.sfrf %931
  %p933 = scmp.eq.s32.totalorder %s932, 0
  %p934 = pneg %p933
  %936 = shalt.err (%p934)
  %s937 = scalar_lea.sflag [#allocation3], 4
  %938 = vsyncmov %s937
  %s939 = vpop.sfrf %938
  %p940 = scmp.eq.s32.totalorder %s939, 0
  %p941 = pneg %p940
  %943 = shalt.err (%p941)
  %s944 = scalar_lea.sflag [#allocation3], 5
  %945 = vsyncmov %s944
  %s946 = vpop.sfrf %945
  %p947 = scmp.eq.s32.totalorder %s946, 0
  %p948 = pneg %p947
  %950 = shalt.err (%p948)
  %s951 = scalar_lea.sflag [#allocation3], 6
  %952 = vsyncmov %s951
  %s953 = vpop.sfrf %952
  %p954 = scmp.eq.s32.totalorder %s953, 0
  %p955 = pneg %p954
  %957 = shalt.err (%p955)
  %s958 = scalar_lea.sflag [#allocation3], 7
  %959 = vsyncmov %s958
  %s960 = vpop.sfrf %959
  %p961 = scmp.eq.s32.totalorder %s960, 0
  %p962 = pneg %p961
  %964 = shalt.err (%p962)

</llo_original>
